<compile_context>
chip_gen: v7x
topology: tpu7x:2x2x1
jax: 0.10.0
libtpu: 0.0.40
codegen_flags: <defaults>
</compile_context>

<pallas_src>
import jax
import jax.numpy as jnp
from jax import lax
from jax.experimental import pallas as pl
from jax.experimental.pallas import tpu as pltpu

# ---------------- problem sizes (small, synthetic) ----------------
N, CIN, H, W = 2, 4, 16, 16      # input (PyTorch NCHW: [2, 4, 16, 16])
C1 = 8                           # channels after target1 / target2
C2 = 16                          # channels after target3
HW = H * W                       # 256 -> lane axis (two full lane tiles)
CINP = 8                         # input channels zero-padded to a sublane group
PAD = 128                        # halo on the flat spatial axis (lane-tile aligned)
# 3x3 taps as (sy, sx) = (dy-1, dx-1); flat shift = sy*W + sx, |shift| <= 17 < PAD
_OFFSETS = tuple((dy - 1, dx - 1) for dy in range(3) for dx in range(3))


def fused_targets_kernel(x_ref, w1_ref, b1_ref, w2_ref, b2_ref, w3_ref, b3_ref,
                         o_ref, xpf_ref, h1pf_ref):
    """Single grid step; both images processed here, everything stays in VMEM.

    x_ref   : (N, CIN, HW)       input, channels-first, flat spatial on lanes
    w1_ref  : (C1, 9*CINP)       target1 im2col weight (cin rows 4..7 are zero)
    b1_ref  : (C1, 1)
    w2_ref  : (C1, 9)            target2 depthwise taps, one column per (dy,dx)
    b2_ref  : (C1, 1)
    w3_ref  : (C2, C1)           target3 pointwise weight (transposed)
    b3_ref  : (C2, 1)
    o_ref   : (N, C2, HW)        output (lane-dense 256-wide stores)
    xpf_ref : (CINP, HW+2*PAD)   VMEM scratch: zero-padded flat input image
    h1pf_ref: (C1,   HW+2*PAD)   VMEM scratch: zero-padded flat target1 output
    """
    # Zero the scratches once (single grid step).  The interiors are fully
    # overwritten for every image; the halo / padded channel rows stay zero.
    xpf_ref[...] = jnp.zeros((CINP, HW + 2 * PAD), jnp.float32)
    h1pf_ref[...] = jnp.zeros((C1, HW + 2 * PAD), jnp.float32)

    # Column index within each image row (W is a power of two).  The masks kill
    # the wrap-around that a flat +-1 shift would otherwise read from the
    # neighbouring image row.  (CINP == C1 == 8 so one mask shape serves both.)
    col = jnp.bitwise_and(lax.broadcasted_iota(jnp.int32, (CINP, HW), 1), W - 1)
    ok_left = col >= 1          # valid source column when sx = -1
    ok_right = col <= W - 2     # valid source column when sx = +1

    def window(ref, sy, sx):
        s = sy * W + sx
        win = ref[:, PAD + s:PAD + s + HW]          # (8, HW) lane-dense read
        if sx == -1:
            win = jnp.where(ok_left, win, 0.0)
        elif sx == 1:
            win = jnp.where(ok_right, win, 0.0)
        return win

    for n in range(N):                              # N = 2, unrolled
        # ---- target1: 3x3 conv as ONE im2col matmul on the MXU + ReLU ----
        xpf_ref[0:CIN, PAD:PAD + HW] = x_ref[n]     # interior store; halo stays 0
        patches = jnp.concatenate(
            [window(xpf_ref, sy, sx) for sy, sx in _OFFSETS], axis=0)  # (72, HW)
        h1 = jnp.dot(w1_ref[...], patches,
                     preferred_element_type=jnp.float32) + b1_ref[...]
        h1 = jnp.maximum(h1, 0.0)                   # (C1, HW)

        # ---- target2: 3x3 depthwise conv, 9 lane-dense MACs on the VPU ----
        h1pf_ref[:, PAD:PAD + HW] = h1              # aligned, unmasked store
        acc = jnp.zeros((C1, HW), jnp.float32)
        for k, (sy, sx) in enumerate(_OFFSETS):
            acc = acc + window(h1pf_ref, sy, sx) * w2_ref[:, k:k + 1]
        h2 = jnp.maximum(acc + b2_ref[...], 0.0)    # (C1, HW)

        # ---- target3: 1x1 pointwise conv, one MXU matmul + ReLU ----
        h3 = jnp.dot(w3_ref[...], h2,
                     preferred_element_type=jnp.float32) + b3_ref[...]
        o_ref[n] = jnp.maximum(h3, 0.0)             # (C2, HW) lane-dense store


def prepare_kernel_params(params):
    """One-time re-layout of the canonical conv parameters for the kernel."""
    w1, b1, w2, b2, w3, b3 = params
    # im2col weight: rows ordered (dy,dx)-major, cin-minor, cin padded 4 -> 8.
    w1p = jnp.pad(w1, ((0, 0), (0, 0), (0, CINP - CIN), (0, 0)))    # (3,3,CINP,C1)
    w1mat = w1p.reshape(9 * CINP, C1).T                             # (C1, 9*CINP)
    w2mat = w2.reshape(9, C1).T                                     # (C1, 9)
    w3t = w3.T                                                      # (C2, C1)
    return (w1mat, b1.reshape(C1, 1), w2mat, b2.reshape(C1, 1),
            w3t, b3.reshape(C2, 1))


@jax.jit
def quantizable_model_forward(x_nchw, kparams):
    """Pallas implementation of QuantizableModel.forward (NCHW in / NCHW out)."""
    w1mat, b1c, w2mat, b2c, w3t, b3c = kparams
    # QuantStub / DeQuantStub are identity in float mode: no-ops here.
    x_flat = x_nchw.reshape(N, CIN, HW)          # free reshape (no transpose/pad)

    out = pl.pallas_call(
        fused_targets_kernel,
        out_shape=jax.ShapeDtypeStruct((N, C2, HW), jnp.float32),
        grid_spec=pltpu.PrefetchScalarGridSpec(
            num_scalar_prefetch=0,
            grid=(1,),                            # single step: no per-step overhead
            in_specs=[
                pl.BlockSpec((N, CIN, HW), lambda i: (0, 0, 0)),
                pl.BlockSpec((C1, 9 * CINP), lambda i: (0, 0)),
                pl.BlockSpec((C1, 1), lambda i: (0, 0)),
                pl.BlockSpec((C1, 9), lambda i: (0, 0)),
                pl.BlockSpec((C1, 1), lambda i: (0, 0)),
                pl.BlockSpec((C2, C1), lambda i: (0, 0)),
                pl.BlockSpec((C2, 1), lambda i: (0, 0)),
            ],
            out_specs=pl.BlockSpec((N, C2, HW), lambda i: (0, 0, 0)),
            scratch_shapes=[
                pltpu.VMEM((CINP, HW + 2 * PAD), jnp.float32),
                pltpu.VMEM((C1, HW + 2 * PAD), jnp.float32),
            ],
        ),
        compiler_params=pltpu.CompilerParams(
            dimension_semantics=("arbitrary",)),
    )(x_flat, w1mat, b1c, w2mat, b2c, w3t, b3c)

    return out.reshape(N, C2, H, W)              # free reshape back to NCHW


def reference_forward(x_nchw, params):
    """Pure-JAX reference (lax convs) for correctness checking."""
    w1, b1, w2, b2, w3, b3 = params
    dn = ("NHWC", "HWIO", "NHWC")
    x = jnp.transpose(x_nchw, (0, 2, 3, 1))
    h1 = jax.lax.conv_general_dilated(x, w1, (1, 1), "SAME",
                                      dimension_numbers=dn) + b1
    h1 = jnp.maximum(h1, 0.0)
    h2 = jax.lax.conv_general_dilated(h1, w2.reshape(3, 3, 1, C1), (1, 1),
                                      "SAME", dimension_numbers=dn,
                                      feature_group_count=C1) + b2
    h2 = jnp.maximum(h2, 0.0)
    h3 = jax.lax.conv_general_dilated(h2, w3.reshape(1, 1, C1, C2), (1, 1),
                                      "SAME", dimension_numbers=dn) + b3
    h3 = jnp.maximum(h3, 0.0)
    return jnp.transpose(h3, (0, 3, 1, 2))


def make_params(key):
    k1, k2, k3, k4, k5, k6 = jax.random.split(key, 6)
    w1 = 0.1 * jax.random.normal(k1, (3, 3, CIN, C1), jnp.float32)  # HWIO
    b1 = 0.1 * jax.random.normal(k2, (1, C1), jnp.float32)
    w2 = 0.1 * jax.random.normal(k3, (3, 3, C1), jnp.float32)       # depthwise
    b2 = 0.1 * jax.random.normal(k4, (1, C1), jnp.float32)
    w3 = 0.1 * jax.random.normal(k5, (C1, C2), jnp.float32)         # pointwise
    b3 = 0.1 * jax.random.normal(k6, (1, C2), jnp.float32)
    return (w1, b1, w2, b2, w3, b3)


if __name__ == "__main__":
    key = jax.random.PRNGKey(0)
    kx, kp = jax.random.split(key)
    x = jax.random.normal(kx, (N, CIN, H, W), jnp.float32)   # PyTorch NCHW input
    params = make_params(kp)
    kparams = prepare_kernel_params(params)                  # one-time weight prep

    out = quantizable_model_forward(x, kparams)
    out = jax.block_until_ready(out)

    ref = reference_forward(x, params)
    assert out.shape == (N, C2, H, W)
    assert jnp.allclose(out, ref, rtol=1e-4, atol=1e-4)

    print("KERNEL_OK")
</pallas_src>

<mosaic_0001>
module attributes {stable_mosaic.version = 11 : i64} {
  func.func @fused_targets_kernel(%arg0: i32, %arg1: memref<2x4x256xf32, #tpu.memory_space<vmem>>, %arg2: memref<8x72xf32, #tpu.memory_space<vmem>>, %arg3: memref<8x1xf32, #tpu.memory_space<vmem>>, %arg4: memref<8x9xf32, #tpu.memory_space<vmem>>, %arg5: memref<8x1xf32, #tpu.memory_space<vmem>>, %arg6: memref<16x8xf32, #tpu.memory_space<vmem>>, %arg7: memref<16x1xf32, #tpu.memory_space<vmem>>, %arg8: memref<2x16x256xf32, #tpu.memory_space<vmem>>, %arg9: memref<8x512xf32, #tpu.memory_space<vmem>>, %arg10: memref<8x512xf32, #tpu.memory_space<vmem>>) attributes {dimension_semantics = [#tpu.dimension_semantics<arbitrary>], iteration_bounds = array<i64: 1>, scalar_prefetch = 0 : i64, scratch_operands = 2 : i64, tpu.core_type = #tpu.core_type<tc>, window_params = [{pipeline_mode = #tpu.pipeline_mode<synchronous>, transform_indices = @transform_0, window_bounds = array<i64: 2, 4, 256>}, {pipeline_mode = #tpu.pipeline_mode<synchronous>, transform_indices = @transform_1, window_bounds = array<i64: 8, 72>}, {pipeline_mode = #tpu.pipeline_mode<synchronous>, transform_indices = @transform_2, window_bounds = array<i64: 8, 1>}, {pipeline_mode = #tpu.pipeline_mode<synchronous>, transform_indices = @transform_3, window_bounds = array<i64: 8, 9>}, {pipeline_mode = #tpu.pipeline_mode<synchronous>, transform_indices = @transform_4, window_bounds = array<i64: 8, 1>}, {pipeline_mode = #tpu.pipeline_mode<synchronous>, transform_indices = @transform_5, window_bounds = array<i64: 16, 8>}, {pipeline_mode = #tpu.pipeline_mode<synchronous>, transform_indices = @transform_6, window_bounds = array<i64: 16, 1>}, {pipeline_mode = #tpu.pipeline_mode<synchronous>, transform_indices = @transform_7, window_bounds = array<i64: 2, 16, 256>}]} {
    %cst = arith.constant 0.000000e+00 : f32
    %0 = vector.broadcast %cst : f32 to vector<8x512xf32>
    %c0 = arith.constant 0 : index
    %c0_0 = arith.constant 0 : index
    %1 = vector.load %arg9[%c0, %c0_0] : memref<8x512xf32, #tpu.memory_space<vmem>>, vector<8x512xf32>
    tpu.vector_store %arg9[%c0, %c0_0], %0 {strides = array<i32>} : memref<8x512xf32, #tpu.memory_space<vmem>>, vector<8x512xf32>,
    %cst_1 = arith.constant 0.000000e+00 : f32
    %2 = vector.broadcast %cst_1 : f32 to vector<8x512xf32>
    %c0_2 = arith.constant 0 : index
    %c0_3 = arith.constant 0 : index
    %3 = vector.load %arg10[%c0_2, %c0_3] : memref<8x512xf32, #tpu.memory_space<vmem>>, vector<8x512xf32>
    tpu.vector_store %arg10[%c0_2, %c0_3], %2 {strides = array<i32>} : memref<8x512xf32, #tpu.memory_space<vmem>>, vector<8x512xf32>,
    %4 = tpu.iota {dimensions = array<i32: 1>} : vector<8x256xi32>
    %c15_i32 = arith.constant 15 : i32
    %5 = vector.broadcast %c15_i32 : i32 to vector<8x256xi32>
    %6 = arith.andi %4, %5 : vector<8x256xi32>
    %c1_i32 = arith.constant 1 : i32
    %7 = vector.broadcast %c1_i32 : i32 to vector<8x256xi32>
    %8 = arith.cmpi sge, %6, %7 : vector<8x256xi32>
    %c14_i32 = arith.constant 14 : i32
    %9 = vector.broadcast %c14_i32 : i32 to vector<8x256xi32>
    %10 = arith.cmpi sle, %6, %9 : vector<8x256xi32>
    %c0_4 = arith.constant 0 : index
    %c0_5 = arith.constant 0 : index
    %c0_6 = arith.constant 0 : index
    %11 = vector.load %arg1[%c0_4, %c0_5, %c0_6] : memref<2x4x256xf32, #tpu.memory_space<vmem>>, vector<1x4x256xf32>
    %12 = vector.shape_cast %11 : vector<1x4x256xf32> to vector<4x256xf32>
    %c0_7 = arith.constant 0 : index
    %c128 = arith.constant 128 : index
    %13 = vector.load %arg9[%c0_7, %c128] : memref<8x512xf32, #tpu.memory_space<vmem>>, vector<4x256xf32>
    tpu.vector_store %arg9[%c0_7, %c128], %12 {strides = array<i32>} : memref<8x512xf32, #tpu.memory_space<vmem>>, vector<4x256xf32>,
    %c0_8 = arith.constant 0 : index
    %c111 = arith.constant 111 : index
    %14 = vector.load %arg9[%c0_8, %c111] : memref<8x512xf32, #tpu.memory_space<vmem>>, vector<8x256xf32>
    %cst_9 = arith.constant 0.000000e+00 : f32
    %15 = vector.broadcast %cst_9 : f32 to vector<8x256xf32>
    %16 = arith.select %8, %14, %15 : vector<8x256xi1>, vector<8x256xf32>
    %c0_10 = arith.constant 0 : index
    %c112 = arith.constant 112 : index
    %17 = vector.load %arg9[%c0_10, %c112] : memref<8x512xf32, #tpu.memory_space<vmem>>, vector<8x256xf32>
    %c0_11 = arith.constant 0 : index
    %c113 = arith.constant 113 : index
    %18 = vector.load %arg9[%c0_11, %c113] : memref<8x512xf32, #tpu.memory_space<vmem>>, vector<8x256xf32>
    %cst_12 = arith.constant 0.000000e+00 : f32
    %19 = vector.broadcast %cst_12 : f32 to vector<8x256xf32>
    %20 = arith.select %10, %18, %19 : vector<8x256xi1>, vector<8x256xf32>
    %c0_13 = arith.constant 0 : index
    %c127 = arith.constant 127 : index
    %21 = vector.load %arg9[%c0_13, %c127] : memref<8x512xf32, #tpu.memory_space<vmem>>, vector<8x256xf32>
    %cst_14 = arith.constant 0.000000e+00 : f32
    %22 = vector.broadcast %cst_14 : f32 to vector<8x256xf32>
    %23 = arith.select %8, %21, %22 : vector<8x256xi1>, vector<8x256xf32>
    %c0_15 = arith.constant 0 : index
    %c128_16 = arith.constant 128 : index
    %24 = vector.load %arg9[%c0_15, %c128_16] : memref<8x512xf32, #tpu.memory_space<vmem>>, vector<8x256xf32>
    %c0_17 = arith.constant 0 : index
    %c129 = arith.constant 129 : index
    %25 = vector.load %arg9[%c0_17, %c129] : memref<8x512xf32, #tpu.memory_space<vmem>>, vector<8x256xf32>
    %cst_18 = arith.constant 0.000000e+00 : f32
    %26 = vector.broadcast %cst_18 : f32 to vector<8x256xf32>
    %27 = arith.select %10, %25, %26 : vector<8x256xi1>, vector<8x256xf32>
    %c0_19 = arith.constant 0 : index
    %c143 = arith.constant 143 : index
    %28 = vector.load %arg9[%c0_19, %c143] : memref<8x512xf32, #tpu.memory_space<vmem>>, vector<8x256xf32>
    %cst_20 = arith.constant 0.000000e+00 : f32
    %29 = vector.broadcast %cst_20 : f32 to vector<8x256xf32>
    %30 = arith.select %8, %28, %29 : vector<8x256xi1>, vector<8x256xf32>
    %c0_21 = arith.constant 0 : index
    %c144 = arith.constant 144 : index
    %31 = vector.load %arg9[%c0_21, %c144] : memref<8x512xf32, #tpu.memory_space<vmem>>, vector<8x256xf32>
    %c0_22 = arith.constant 0 : index
    %c145 = arith.constant 145 : index
    %32 = vector.load %arg9[%c0_22, %c145] : memref<8x512xf32, #tpu.memory_space<vmem>>, vector<8x256xf32>
    %cst_23 = arith.constant 0.000000e+00 : f32
    %33 = vector.broadcast %cst_23 : f32 to vector<8x256xf32>
    %34 = arith.select %10, %32, %33 : vector<8x256xi1>, vector<8x256xf32>
    %35 = tpu.concatenate %16, %17, %20, %23, %24, %27, %30, %31, %34 in 0 : vector<8x256xf32>, vector<8x256xf32>, vector<8x256xf32>, vector<8x256xf32>, vector<8x256xf32>, vector<8x256xf32>, vector<8x256xf32>, vector<8x256xf32>, vector<8x256xf32> -> vector<72x256xf32>
    %c0_24 = arith.constant 0 : index
    %c0_25 = arith.constant 0 : index
    %36 = vector.load %arg2[%c0_24, %c0_25] : memref<8x72xf32, #tpu.memory_space<vmem>>, vector<8x72xf32>
    %cst_26 = arith.constant dense<0.000000e+00> : vector<8x256xf32>
    %37 = tpu.matmul %36, %35, %cst_26 {dimension_numbers = #tpu.dot_dimension_numbers<[1], [0], [0], [1], [0, 0, 1, 1], [], []>} : vector<8x72xf32>, vector<72x256xf32>, vector<8x256xf32> -> vector<8x256xf32>
    %c0_27 = arith.constant 0 : index
    %c0_28 = arith.constant 0 : index
    %38 = vector.load %arg3[%c0_27, %c0_28] : memref<8x1xf32, #tpu.memory_space<vmem>>, vector<8x1xf32>
    %39 = vector.broadcast %38 : vector<8x1xf32> to vector<8x256xf32>
    %40 = arith.addf %37, %39 : vector<8x256xf32>
    %cst_29 = arith.constant 0.000000e+00 : f32
    %41 = vector.broadcast %cst_29 : f32 to vector<8x256xf32>
    %42 = arith.maximumf %40, %41 : vector<8x256xf32>
    %c0_30 = arith.constant 0 : index
    %c128_31 = arith.constant 128 : index
    %43 = vector.load %arg10[%c0_30, %c128_31] : memref<8x512xf32, #tpu.memory_space<vmem>>, vector<8x256xf32>
    tpu.vector_store %arg10[%c0_30, %c128_31], %42 {strides = array<i32>} : memref<8x512xf32, #tpu.memory_space<vmem>>, vector<8x256xf32>,
    %cst_32 = arith.constant 0.000000e+00 : f32
    %44 = vector.broadcast %cst_32 : f32 to vector<8x256xf32>
    %c0_33 = arith.constant 0 : index
    %c111_34 = arith.constant 111 : index
    %45 = vector.load %arg10[%c0_33, %c111_34] : memref<8x512xf32, #tpu.memory_space<vmem>>, vector<8x256xf32>
    %cst_35 = arith.constant 0.000000e+00 : f32
    %46 = vector.broadcast %cst_35 : f32 to vector<8x256xf32>
    %47 = arith.select %8, %45, %46 : vector<8x256xi1>, vector<8x256xf32>
    %c0_36 = arith.constant 0 : index
    %c0_37 = arith.constant 0 : index
    %48 = vector.load %arg4[%c0_36, %c0_37] : memref<8x9xf32, #tpu.memory_space<vmem>>, vector<8x1xf32>
    %49 = vector.broadcast %48 : vector<8x1xf32> to vector<8x256xf32>
    %50 = arith.mulf %47, %49 : vector<8x256xf32>
    %51 = arith.addf %44, %50 : vector<8x256xf32>
    %c0_38 = arith.constant 0 : index
    %c112_39 = arith.constant 112 : index
    %52 = vector.load %arg10[%c0_38, %c112_39] : memref<8x512xf32, #tpu.memory_space<vmem>>, vector<8x256xf32>
    %c0_40 = arith.constant 0 : index
    %c1 = arith.constant 1 : index
    %53 = vector.load %arg4[%c0_40, %c1] : memref<8x9xf32, #tpu.memory_space<vmem>>, vector<8x1xf32>
    %54 = vector.broadcast %53 : vector<8x1xf32> to vector<8x256xf32>
    %55 = arith.mulf %52, %54 : vector<8x256xf32>
    %56 = arith.addf %51, %55 : vector<8x256xf32>
    %c0_41 = arith.constant 0 : index
    %c113_42 = arith.constant 113 : index
    %57 = vector.load %arg10[%c0_41, %c113_42] : memref<8x512xf32, #tpu.memory_space<vmem>>, vector<8x256xf32>
    %cst_43 = arith.constant 0.000000e+00 : f32
    %58 = vector.broadcast %cst_43 : f32 to vector<8x256xf32>
    %59 = arith.select %10, %57, %58 : vector<8x256xi1>, vector<8x256xf32>
    %c0_44 = arith.constant 0 : index
    %c2 = arith.constant 2 : index
    %60 = vector.load %arg4[%c0_44, %c2] : memref<8x9xf32, #tpu.memory_space<vmem>>, vector<8x1xf32>
    %61 = vector.broadcast %60 : vector<8x1xf32> to vector<8x256xf32>
    %62 = arith.mulf %59, %61 : vector<8x256xf32>
    %63 = arith.addf %56, %62 : vector<8x256xf32>
    %c0_45 = arith.constant 0 : index
    %c127_46 = arith.constant 127 : index
    %64 = vector.load %arg10[%c0_45, %c127_46] : memref<8x512xf32, #tpu.memory_space<vmem>>, vector<8x256xf32>
    %cst_47 = arith.constant 0.000000e+00 : f32
    %65 = vector.broadcast %cst_47 : f32 to vector<8x256xf32>
    %66 = arith.select %8, %64, %65 : vector<8x256xi1>, vector<8x256xf32>
    %c0_48 = arith.constant 0 : index
    %c3 = arith.constant 3 : index
    %67 = vector.load %arg4[%c0_48, %c3] : memref<8x9xf32, #tpu.memory_space<vmem>>, vector<8x1xf32>
    %68 = vector.broadcast %67 : vector<8x1xf32> to vector<8x256xf32>
    %69 = arith.mulf %66, %68 : vector<8x256xf32>
    %70 = arith.addf %63, %69 : vector<8x256xf32>
    %c0_49 = arith.constant 0 : index
    %c128_50 = arith.constant 128 : index
    %71 = vector.load %arg10[%c0_49, %c128_50] : memref<8x512xf32, #tpu.memory_space<vmem>>, vector<8x256xf32>
    %c0_51 = arith.constant 0 : index
    %c4 = arith.constant 4 : index
    %72 = vector.load %arg4[%c0_51, %c4] : memref<8x9xf32, #tpu.memory_space<vmem>>, vector<8x1xf32>
    %73 = vector.broadcast %72 : vector<8x1xf32> to vector<8x256xf32>
    %74 = arith.mulf %71, %73 : vector<8x256xf32>
    %75 = arith.addf %70, %74 : vector<8x256xf32>
    %c0_52 = arith.constant 0 : index
    %c129_53 = arith.constant 129 : index
    %76 = vector.load %arg10[%c0_52, %c129_53] : memref<8x512xf32, #tpu.memory_space<vmem>>, vector<8x256xf32>
    %cst_54 = arith.constant 0.000000e+00 : f32
    %77 = vector.broadcast %cst_54 : f32 to vector<8x256xf32>
    %78 = arith.select %10, %76, %77 : vector<8x256xi1>, vector<8x256xf32>
    %c0_55 = arith.constant 0 : index
    %c5 = arith.constant 5 : index
    %79 = vector.load %arg4[%c0_55, %c5] : memref<8x9xf32, #tpu.memory_space<vmem>>, vector<8x1xf32>
    %80 = vector.broadcast %79 : vector<8x1xf32> to vector<8x256xf32>
    %81 = arith.mulf %78, %80 : vector<8x256xf32>
    %82 = arith.addf %75, %81 : vector<8x256xf32>
    %c0_56 = arith.constant 0 : index
    %c143_57 = arith.constant 143 : index
    %83 = vector.load %arg10[%c0_56, %c143_57] : memref<8x512xf32, #tpu.memory_space<vmem>>, vector<8x256xf32>
    %cst_58 = arith.constant 0.000000e+00 : f32
    %84 = vector.broadcast %cst_58 : f32 to vector<8x256xf32>
    %85 = arith.select %8, %83, %84 : vector<8x256xi1>, vector<8x256xf32>
    %c0_59 = arith.constant 0 : index
    %c6 = arith.constant 6 : index
    %86 = vector.load %arg4[%c0_59, %c6] : memref<8x9xf32, #tpu.memory_space<vmem>>, vector<8x1xf32>
    %87 = vector.broadcast %86 : vector<8x1xf32> to vector<8x256xf32>
    %88 = arith.mulf %85, %87 : vector<8x256xf32>
    %89 = arith.addf %82, %88 : vector<8x256xf32>
    %c0_60 = arith.constant 0 : index
    %c144_61 = arith.constant 144 : index
    %90 = vector.load %arg10[%c0_60, %c144_61] : memref<8x512xf32, #tpu.memory_space<vmem>>, vector<8x256xf32>
    %c0_62 = arith.constant 0 : index
    %c7 = arith.constant 7 : index
    %91 = vector.load %arg4[%c0_62, %c7] : memref<8x9xf32, #tpu.memory_space<vmem>>, vector<8x1xf32>
    %92 = vector.broadcast %91 : vector<8x1xf32> to vector<8x256xf32>
    %93 = arith.mulf %90, %92 : vector<8x256xf32>
    %94 = arith.addf %89, %93 : vector<8x256xf32>
    %c0_63 = arith.constant 0 : index
    %c145_64 = arith.constant 145 : index
    %95 = vector.load %arg10[%c0_63, %c145_64] : memref<8x512xf32, #tpu.memory_space<vmem>>, vector<8x256xf32>
    %cst_65 = arith.constant 0.000000e+00 : f32
    %96 = vector.broadcast %cst_65 : f32 to vector<8x256xf32>
    %97 = arith.select %10, %95, %96 : vector<8x256xi1>, vector<8x256xf32>
    %c0_66 = arith.constant 0 : index
    %c8 = arith.constant 8 : index
    %98 = vector.load %arg4[%c0_66, %c8] : memref<8x9xf32, #tpu.memory_space<vmem>>, vector<8x1xf32>
    %99 = vector.broadcast %98 : vector<8x1xf32> to vector<8x256xf32>
    %100 = arith.mulf %97, %99 : vector<8x256xf32>
    %101 = arith.addf %94, %100 : vector<8x256xf32>
    %c0_67 = arith.constant 0 : index
    %c0_68 = arith.constant 0 : index
    %102 = vector.load %arg5[%c0_67, %c0_68] : memref<8x1xf32, #tpu.memory_space<vmem>>, vector<8x1xf32>
    %103 = vector.broadcast %102 : vector<8x1xf32> to vector<8x256xf32>
    %104 = arith.addf %101, %103 : vector<8x256xf32>
    %cst_69 = arith.constant 0.000000e+00 : f32
    %105 = vector.broadcast %cst_69 : f32 to vector<8x256xf32>
    %106 = arith.maximumf %104, %105 : vector<8x256xf32>
    %c0_70 = arith.constant 0 : index
    %c0_71 = arith.constant 0 : index
    %107 = vector.load %arg6[%c0_70, %c0_71] : memref<16x8xf32, #tpu.memory_space<vmem>>, vector<16x8xf32>
    %cst_72 = arith.constant dense<0.000000e+00> : vector<16x256xf32>
    %108 = tpu.matmul %107, %106, %cst_72 {dimension_numbers = #tpu.dot_dimension_numbers<[1], [0], [0], [1], [0, 0, 1, 1], [], []>} : vector<16x8xf32>, vector<8x256xf32>, vector<16x256xf32> -> vector<16x256xf32>
    %c0_73 = arith.constant 0 : index
    %c0_74 = arith.constant 0 : index
    %109 = vector.load %arg7[%c0_73, %c0_74] : memref<16x1xf32, #tpu.memory_space<vmem>>, vector<16x1xf32>
    %110 = vector.broadcast %109 : vector<16x1xf32> to vector<16x256xf32>
    %111 = arith.addf %108, %110 : vector<16x256xf32>
    %cst_75 = arith.constant 0.000000e+00 : f32
    %112 = vector.broadcast %cst_75 : f32 to vector<16x256xf32>
    %113 = arith.maximumf %111, %112 : vector<16x256xf32>
    %c0_76 = arith.constant 0 : index
    %c0_77 = arith.constant 0 : index
    %c0_78 = arith.constant 0 : index
    %114 = vector.load %arg8[%c0_76, %c0_77, %c0_78] : memref<2x16x256xf32, #tpu.memory_space<vmem>>, vector<1x16x256xf32>
    %115 = vector.shape_cast %114 : vector<1x16x256xf32> to vector<16x256xf32>
    %116 = vector.shape_cast %113 : vector<16x256xf32> to vector<1x16x256xf32>
    tpu.vector_store %arg8[%c0_76, %c0_77, %c0_78], %116 {strides = array<i32>} : memref<2x16x256xf32, #tpu.memory_space<vmem>>, vector<1x16x256xf32>,
    %c1_79 = arith.constant 1 : index
    %c0_80 = arith.constant 0 : index
    %c0_81 = arith.constant 0 : index
    %117 = vector.load %arg1[%c1_79, %c0_80, %c0_81] : memref<2x4x256xf32, #tpu.memory_space<vmem>>, vector<1x4x256xf32>
    %118 = vector.shape_cast %117 : vector<1x4x256xf32> to vector<4x256xf32>
    %c0_82 = arith.constant 0 : index
    %c128_83 = arith.constant 128 : index
    %119 = vector.load %arg9[%c0_82, %c128_83] : memref<8x512xf32, #tpu.memory_space<vmem>>, vector<4x256xf32>
    tpu.vector_store %arg9[%c0_82, %c128_83], %118 {strides = array<i32>} : memref<8x512xf32, #tpu.memory_space<vmem>>, vector<4x256xf32>,
    %c0_84 = arith.constant 0 : index
    %c111_85 = arith.constant 111 : index
    %120 = vector.load %arg9[%c0_84, %c111_85] : memref<8x512xf32, #tpu.memory_space<vmem>>, vector<8x256xf32>
    %cst_86 = arith.constant 0.000000e+00 : f32
    %121 = vector.broadcast %cst_86 : f32 to vector<8x256xf32>
    %122 = arith.select %8, %120, %121 : vector<8x256xi1>, vector<8x256xf32>
    %c0_87 = arith.constant 0 : index
    %c112_88 = arith.constant 112 : index
    %123 = vector.load %arg9[%c0_87, %c112_88] : memref<8x512xf32, #tpu.memory_space<vmem>>, vector<8x256xf32>
    %c0_89 = arith.constant 0 : index
    %c113_90 = arith.constant 113 : index
    %124 = vector.load %arg9[%c0_89, %c113_90] : memref<8x512xf32, #tpu.memory_space<vmem>>, vector<8x256xf32>
    %cst_91 = arith.constant 0.000000e+00 : f32
    %125 = vector.broadcast %cst_91 : f32 to vector<8x256xf32>
    %126 = arith.select %10, %124, %125 : vector<8x256xi1>, vector<8x256xf32>
    %c0_92 = arith.constant 0 : index
    %c127_93 = arith.constant 127 : index
    %127 = vector.load %arg9[%c0_92, %c127_93] : memref<8x512xf32, #tpu.memory_space<vmem>>, vector<8x256xf32>
    %cst_94 = arith.constant 0.000000e+00 : f32
    %128 = vector.broadcast %cst_94 : f32 to vector<8x256xf32>
    %129 = arith.select %8, %127, %128 : vector<8x256xi1>, vector<8x256xf32>
    %c0_95 = arith.constant 0 : index
    %c128_96 = arith.constant 128 : index
    %130 = vector.load %arg9[%c0_95, %c128_96] : memref<8x512xf32, #tpu.memory_space<vmem>>, vector<8x256xf32>
    %c0_97 = arith.constant 0 : index
    %c129_98 = arith.constant 129 : index
    %131 = vector.load %arg9[%c0_97, %c129_98] : memref<8x512xf32, #tpu.memory_space<vmem>>, vector<8x256xf32>
    %cst_99 = arith.constant 0.000000e+00 : f32
    %132 = vector.broadcast %cst_99 : f32 to vector<8x256xf32>
    %133 = arith.select %10, %131, %132 : vector<8x256xi1>, vector<8x256xf32>
    %c0_100 = arith.constant 0 : index
    %c143_101 = arith.constant 143 : index
    %134 = vector.load %arg9[%c0_100, %c143_101] : memref<8x512xf32, #tpu.memory_space<vmem>>, vector<8x256xf32>
    %cst_102 = arith.constant 0.000000e+00 : f32
    %135 = vector.broadcast %cst_102 : f32 to vector<8x256xf32>
    %136 = arith.select %8, %134, %135 : vector<8x256xi1>, vector<8x256xf32>
    %c0_103 = arith.constant 0 : index
    %c144_104 = arith.constant 144 : index
    %137 = vector.load %arg9[%c0_103, %c144_104] : memref<8x512xf32, #tpu.memory_space<vmem>>, vector<8x256xf32>
    %c0_105 = arith.constant 0 : index
    %c145_106 = arith.constant 145 : index
    %138 = vector.load %arg9[%c0_105, %c145_106] : memref<8x512xf32, #tpu.memory_space<vmem>>, vector<8x256xf32>
    %cst_107 = arith.constant 0.000000e+00 : f32
    %139 = vector.broadcast %cst_107 : f32 to vector<8x256xf32>
    %140 = arith.select %10, %138, %139 : vector<8x256xi1>, vector<8x256xf32>
    %141 = tpu.concatenate %122, %123, %126, %129, %130, %133, %136, %137, %140 in 0 : vector<8x256xf32>, vector<8x256xf32>, vector<8x256xf32>, vector<8x256xf32>, vector<8x256xf32>, vector<8x256xf32>, vector<8x256xf32>, vector<8x256xf32>, vector<8x256xf32> -> vector<72x256xf32>
    %c0_108 = arith.constant 0 : index
    %c0_109 = arith.constant 0 : index
    %142 = vector.load %arg2[%c0_108, %c0_109] : memref<8x72xf32, #tpu.memory_space<vmem>>, vector<8x72xf32>
    %cst_110 = arith.constant dense<0.000000e+00> : vector<8x256xf32>
    %143 = tpu.matmul %142, %141, %cst_110 {dimension_numbers = #tpu.dot_dimension_numbers<[1], [0], [0], [1], [0, 0, 1, 1], [], []>} : vector<8x72xf32>, vector<72x256xf32>, vector<8x256xf32> -> vector<8x256xf32>
    %c0_111 = arith.constant 0 : index
    %c0_112 = arith.constant 0 : index
    %144 = vector.load %arg3[%c0_111, %c0_112] : memref<8x1xf32, #tpu.memory_space<vmem>>, vector<8x1xf32>
    %145 = vector.broadcast %144 : vector<8x1xf32> to vector<8x256xf32>
    %146 = arith.addf %143, %145 : vector<8x256xf32>
    %cst_113 = arith.constant 0.000000e+00 : f32
    %147 = vector.broadcast %cst_113 : f32 to vector<8x256xf32>
    %148 = arith.maximumf %146, %147 : vector<8x256xf32>
    %c0_114 = arith.constant 0 : index
    %c128_115 = arith.constant 128 : index
    %149 = vector.load %arg10[%c0_114, %c128_115] : memref<8x512xf32, #tpu.memory_space<vmem>>, vector<8x256xf32>
    tpu.vector_store %arg10[%c0_114, %c128_115], %148 {strides = array<i32>} : memref<8x512xf32, #tpu.memory_space<vmem>>, vector<8x256xf32>,
    %cst_116 = arith.constant 0.000000e+00 : f32
    %150 = vector.broadcast %cst_116 : f32 to vector<8x256xf32>
    %c0_117 = arith.constant 0 : index
    %c111_118 = arith.constant 111 : index
    %151 = vector.load %arg10[%c0_117, %c111_118] : memref<8x512xf32, #tpu.memory_space<vmem>>, vector<8x256xf32>
    %cst_119 = arith.constant 0.000000e+00 : f32
    %152 = vector.broadcast %cst_119 : f32 to vector<8x256xf32>
    %153 = arith.select %8, %151, %152 : vector<8x256xi1>, vector<8x256xf32>
    %c0_120 = arith.constant 0 : index
    %c0_121 = arith.constant 0 : index
    %154 = vector.load %arg4[%c0_120, %c0_121] : memref<8x9xf32, #tpu.memory_space<vmem>>, vector<8x1xf32>
    %155 = vector.broadcast %154 : vector<8x1xf32> to vector<8x256xf32>
    %156 = arith.mulf %153, %155 : vector<8x256xf32>
    %157 = arith.addf %150, %156 : vector<8x256xf32>
    %c0_122 = arith.constant 0 : index
    %c112_123 = arith.constant 112 : index
    %158 = vector.load %arg10[%c0_122, %c112_123] : memref<8x512xf32, #tpu.memory_space<vmem>>, vector<8x256xf32>
    %c0_124 = arith.constant 0 : index
    %c1_125 = arith.constant 1 : index
    %159 = vector.load %arg4[%c0_124, %c1_125] : memref<8x9xf32, #tpu.memory_space<vmem>>, vector<8x1xf32>
    %160 = vector.broadcast %159 : vector<8x1xf32> to vector<8x256xf32>
    %161 = arith.mulf %158, %160 : vector<8x256xf32>
    %162 = arith.addf %157, %161 : vector<8x256xf32>
    %c0_126 = arith.constant 0 : index
    %c113_127 = arith.constant 113 : index
    %163 = vector.load %arg10[%c0_126, %c113_127] : memref<8x512xf32, #tpu.memory_space<vmem>>, vector<8x256xf32>
    %cst_128 = arith.constant 0.000000e+00 : f32
    %164 = vector.broadcast %cst_128 : f32 to vector<8x256xf32>
    %165 = arith.select %10, %163, %164 : vector<8x256xi1>, vector<8x256xf32>
    %c0_129 = arith.constant 0 : index
    %c2_130 = arith.constant 2 : index
    %166 = vector.load %arg4[%c0_129, %c2_130] : memref<8x9xf32, #tpu.memory_space<vmem>>, vector<8x1xf32>
    %167 = vector.broadcast %166 : vector<8x1xf32> to vector<8x256xf32>
    %168 = arith.mulf %165, %167 : vector<8x256xf32>
    %169 = arith.addf %162, %168 : vector<8x256xf32>
    %c0_131 = arith.constant 0 : index
    %c127_132 = arith.constant 127 : index
    %170 = vector.load %arg10[%c0_131, %c127_132] : memref<8x512xf32, #tpu.memory_space<vmem>>, vector<8x256xf32>
    %cst_133 = arith.constant 0.000000e+00 : f32
    %171 = vector.broadcast %cst_133 : f32 to vector<8x256xf32>
    %172 = arith.select %8, %170, %171 : vector<8x256xi1>, vector<8x256xf32>
    %c0_134 = arith.constant 0 : index
    %c3_135 = arith.constant 3 : index
    %173 = vector.load %arg4[%c0_134, %c3_135] : memref<8x9xf32, #tpu.memory_space<vmem>>, vector<8x1xf32>
    %174 = vector.broadcast %173 : vector<8x1xf32> to vector<8x256xf32>
    %175 = arith.mulf %172, %174 : vector<8x256xf32>
    %176 = arith.addf %169, %175 : vector<8x256xf32>
    %c0_136 = arith.constant 0 : index
    %c128_137 = arith.constant 128 : index
    %177 = vector.load %arg10[%c0_136, %c128_137] : memref<8x512xf32, #tpu.memory_space<vmem>>, vector<8x256xf32>
    %c0_138 = arith.constant 0 : index
    %c4_139 = arith.constant 4 : index
    %178 = vector.load %arg4[%c0_138, %c4_139] : memref<8x9xf32, #tpu.memory_space<vmem>>, vector<8x1xf32>
    %179 = vector.broadcast %178 : vector<8x1xf32> to vector<8x256xf32>
    %180 = arith.mulf %177, %179 : vector<8x256xf32>
    %181 = arith.addf %176, %180 : vector<8x256xf32>
    %c0_140 = arith.constant 0 : index
    %c129_141 = arith.constant 129 : index
    %182 = vector.load %arg10[%c0_140, %c129_141] : memref<8x512xf32, #tpu.memory_space<vmem>>, vector<8x256xf32>
    %cst_142 = arith.constant 0.000000e+00 : f32
    %183 = vector.broadcast %cst_142 : f32 to vector<8x256xf32>
    %184 = arith.select %10, %182, %183 : vector<8x256xi1>, vector<8x256xf32>
    %c0_143 = arith.constant 0 : index
    %c5_144 = arith.constant 5 : index
    %185 = vector.load %arg4[%c0_143, %c5_144] : memref<8x9xf32, #tpu.memory_space<vmem>>, vector<8x1xf32>
    %186 = vector.broadcast %185 : vector<8x1xf32> to vector<8x256xf32>
    %187 = arith.mulf %184, %186 : vector<8x256xf32>
    %188 = arith.addf %181, %187 : vector<8x256xf32>
    %c0_145 = arith.constant 0 : index
    %c143_146 = arith.constant 143 : index
    %189 = vector.load %arg10[%c0_145, %c143_146] : memref<8x512xf32, #tpu.memory_space<vmem>>, vector<8x256xf32>
    %cst_147 = arith.constant 0.000000e+00 : f32
    %190 = vector.broadcast %cst_147 : f32 to vector<8x256xf32>
    %191 = arith.select %8, %189, %190 : vector<8x256xi1>, vector<8x256xf32>
    %c0_148 = arith.constant 0 : index
    %c6_149 = arith.constant 6 : index
    %192 = vector.load %arg4[%c0_148, %c6_149] : memref<8x9xf32, #tpu.memory_space<vmem>>, vector<8x1xf32>
    %193 = vector.broadcast %192 : vector<8x1xf32> to vector<8x256xf32>
    %194 = arith.mulf %191, %193 : vector<8x256xf32>
    %195 = arith.addf %188, %194 : vector<8x256xf32>
    %c0_150 = arith.constant 0 : index
    %c144_151 = arith.constant 144 : index
    %196 = vector.load %arg10[%c0_150, %c144_151] : memref<8x512xf32, #tpu.memory_space<vmem>>, vector<8x256xf32>
    %c0_152 = arith.constant 0 : index
    %c7_153 = arith.constant 7 : index
    %197 = vector.load %arg4[%c0_152, %c7_153] : memref<8x9xf32, #tpu.memory_space<vmem>>, vector<8x1xf32>
    %198 = vector.broadcast %197 : vector<8x1xf32> to vector<8x256xf32>
    %199 = arith.mulf %196, %198 : vector<8x256xf32>
    %200 = arith.addf %195, %199 : vector<8x256xf32>
    %c0_154 = arith.constant 0 : index
    %c145_155 = arith.constant 145 : index
    %201 = vector.load %arg10[%c0_154, %c145_155] : memref<8x512xf32, #tpu.memory_space<vmem>>, vector<8x256xf32>
    %cst_156 = arith.constant 0.000000e+00 : f32
    %202 = vector.broadcast %cst_156 : f32 to vector<8x256xf32>
    %203 = arith.select %10, %201, %202 : vector<8x256xi1>, vector<8x256xf32>
    %c0_157 = arith.constant 0 : index
    %c8_158 = arith.constant 8 : index
    %204 = vector.load %arg4[%c0_157, %c8_158] : memref<8x9xf32, #tpu.memory_space<vmem>>, vector<8x1xf32>
    %205 = vector.broadcast %204 : vector<8x1xf32> to vector<8x256xf32>
    %206 = arith.mulf %203, %205 : vector<8x256xf32>
    %207 = arith.addf %200, %206 : vector<8x256xf32>
    %c0_159 = arith.constant 0 : index
    %c0_160 = arith.constant 0 : index
    %208 = vector.load %arg5[%c0_159, %c0_160] : memref<8x1xf32, #tpu.memory_space<vmem>>, vector<8x1xf32>
    %209 = vector.broadcast %208 : vector<8x1xf32> to vector<8x256xf32>
    %210 = arith.addf %207, %209 : vector<8x256xf32>
    %cst_161 = arith.constant 0.000000e+00 : f32
    %211 = vector.broadcast %cst_161 : f32 to vector<8x256xf32>
    %212 = arith.maximumf %210, %211 : vector<8x256xf32>
    %c0_162 = arith.constant 0 : index
    %c0_163 = arith.constant 0 : index
    %213 = vector.load %arg6[%c0_162, %c0_163] : memref<16x8xf32, #tpu.memory_space<vmem>>, vector<16x8xf32>
    %cst_164 = arith.constant dense<0.000000e+00> : vector<16x256xf32>
    %214 = tpu.matmul %213, %212, %cst_164 {dimension_numbers = #tpu.dot_dimension_numbers<[1], [0], [0], [1], [0, 0, 1, 1], [], []>} : vector<16x8xf32>, vector<8x256xf32>, vector<16x256xf32> -> vector<16x256xf32>
    %c0_165 = arith.constant 0 : index
    %c0_166 = arith.constant 0 : index
    %215 = vector.load %arg7[%c0_165, %c0_166] : memref<16x1xf32, #tpu.memory_space<vmem>>, vector<16x1xf32>
    %216 = vector.broadcast %215 : vector<16x1xf32> to vector<16x256xf32>
    %217 = arith.addf %214, %216 : vector<16x256xf32>
    %cst_167 = arith.constant 0.000000e+00 : f32
    %218 = vector.broadcast %cst_167 : f32 to vector<16x256xf32>
    %219 = arith.maximumf %217, %218 : vector<16x256xf32>
    %c1_168 = arith.constant 1 : index
    %c0_169 = arith.constant 0 : index
    %c0_170 = arith.constant 0 : index
    %220 = vector.load %arg8[%c1_168, %c0_169, %c0_170] : memref<2x16x256xf32, #tpu.memory_space<vmem>>, vector<1x16x256xf32>
    %221 = vector.shape_cast %220 : vector<1x16x256xf32> to vector<16x256xf32>
    %222 = vector.shape_cast %219 : vector<16x256xf32> to vector<1x16x256xf32>
    tpu.vector_store %arg8[%c1_168, %c0_169, %c0_170], %222 {strides = array<i32>} : memref<2x16x256xf32, #tpu.memory_space<vmem>>, vector<1x16x256xf32>,
    return
  }
  func.func @transform_0(%arg0: i32) -> (i32, i32, i32) {
    %c0_i32 = arith.constant 0 : i32
    %c0_i32_0 = arith.constant 0 : i32
    %c0_i32_1 = arith.constant 0 : i32
    %c0_i32_2 = arith.constant 0 : i32
    return %c0_i32, %c0_i32_0, %c0_i32_1 : i32, i32, i32
  }
  func.func @transform_1(%arg0: i32) -> (i32, i32) {
    %c0_i32 = arith.constant 0 : i32
    %c0_i32_0 = arith.constant 0 : i32
    %c0_i32_1 = arith.constant 0 : i32
    return %c0_i32, %c0_i32_0 : i32, i32
  }
  func.func @transform_2(%arg0: i32) -> (i32, i32) {
    %c0_i32 = arith.constant 0 : i32
    %c0_i32_0 = arith.constant 0 : i32
    %c0_i32_1 = arith.constant 0 : i32
    return %c0_i32, %c0_i32_0 : i32, i32
  }
  func.func @transform_3(%arg0: i32) -> (i32, i32) {
    %c0_i32 = arith.constant 0 : i32
    %c0_i32_0 = arith.constant 0 : i32
    %c0_i32_1 = arith.constant 0 : i32
    return %c0_i32, %c0_i32_0 : i32, i32
  }
  func.func @transform_4(%arg0: i32) -> (i32, i32) {
    %c0_i32 = arith.constant 0 : i32
    %c0_i32_0 = arith.constant 0 : i32
    %c0_i32_1 = arith.constant 0 : i32
    return %c0_i32, %c0_i32_0 : i32, i32
  }
  func.func @transform_5(%arg0: i32) -> (i32, i32) {
    %c0_i32 = arith.constant 0 : i32
    %c0_i32_0 = arith.constant 0 : i32
    %c0_i32_1 = arith.constant 0 : i32
    return %c0_i32, %c0_i32_0 : i32, i32
  }
  func.func @transform_6(%arg0: i32) -> (i32, i32) {
    %c0_i32 = arith.constant 0 : i32
    %c0_i32_0 = arith.constant 0 : i32
    %c0_i32_1 = arith.constant 0 : i32
    return %c0_i32, %c0_i32_0 : i32, i32
  }
  func.func @transform_7(%arg0: i32) -> (i32, i32, i32) {
    %c0_i32 = arith.constant 0 : i32
    %c0_i32_0 = arith.constant 0 : i32
    %c0_i32_1 = arith.constant 0 : i32
    %c0_i32_2 = arith.constant 0 : i32
    return %c0_i32, %c0_i32_0, %c0_i32_1 : i32, i32, i32
  }
}

</mosaic_0001>

<llo_original>
// kernel: quantizable_model_forward.1
$region0: #{quantizable_model_forward.1}
  #allocation0 [shape = 'u32[]', space=smem, size = 0x4, offset = 0x4, fixed_abs, tag = 'smem constant byte address 0x4 - core index']
  #allocation1 [shape = 'u32[144,128]{1,0:T(1,128)}', space=vmem, size = 0x12000, scoped, tag = 'internal scratch']
  #allocation2 [shape = 'f32[8,512]{1,0:T(8,128)}', space=vmem, size = 0x4000, scoped, tag = 'scratch operand']
  #allocation3 [shape = 'f32[8,512]{1,0:T(8,128)}', space=vmem, size = 0x4000, scoped, tag = 'scratch operand']
  %s0 = inlined_call_operand.vmem [shape: f32[2,4,256], index: 0, kind: input, shape index: {}]
  %s1 = inlined_call_operand.vmem [shape: f32[8,72], index: 1, kind: input, shape index: {}]
  %s2 = inlined_call_operand.vmem [shape: f32[8,1], index: 2, kind: input, shape index: {}]
  %s3 = inlined_call_operand.vmem [shape: f32[8,9], index: 3, kind: input, shape index: {}]
  %s4 = inlined_call_operand.vmem [shape: f32[8,1], index: 4, kind: input, shape index: {}]
  %s5 = inlined_call_operand.vmem [shape: f32[16,8], index: 5, kind: input, shape index: {}]
  %s6 = inlined_call_operand.vmem [shape: f32[16,1], index: 6, kind: input, shape index: {}]
  %s7 = inlined_call_operand.vmem [shape: f32[2,16,256], index: 7, kind: output, shape index: {}]
  %s8 = sld [smem:[#allocation0]]
  $region38: #{quantizable_model_forward.1} parent=0
    _
  %s10 = ssub.s32 1, %s8
  %s11 = scalar_select 0, %s10, %s8
  // Predicated region
  $region2: #{quantizable_model_forward.1} parent=0 // pred_check
    _
  $region3: #{quantizable_model_forward.1} parent=0 // pred_check_branch
    %13 = sbr.rel (0) target = $region5
  $region4: #{quantizable_model_forward.1} parent=0 // pred_region
    _
  $region5: #{quantizable_model_forward.1} parent=0 // pred_fallthru
    _
  // Predicated region
  $region6: #{quantizable_model_forward.1} parent=0 // pred_check
    _
  $region7: #{quantizable_model_forward.1} parent=0 // pred_check_branch
    %15 = sbr.rel (0) target = $region9
  $region8: #{quantizable_model_forward.1} parent=0 // pred_region
    _
  $region9: #{quantizable_model_forward.1} parent=0 // pred_fallthru
    _
  // Predicated region
  $region10: #{quantizable_model_forward.1} parent=0 // pred_check
    _
  $region11: #{quantizable_model_forward.1} parent=0 // pred_check_branch
    %17 = sbr.rel (0) target = $region13
  $region12: #{quantizable_model_forward.1} parent=0 // pred_region
    _
  $region13: #{quantizable_model_forward.1} parent=0 // pred_fallthru
    _
  // Predicated region
  $region14: #{quantizable_model_forward.1} parent=0 // pred_check
    _
  $region15: #{quantizable_model_forward.1} parent=0 // pred_check_branch
    %19 = sbr.rel (0) target = $region17
  $region16: #{quantizable_model_forward.1} parent=0 // pred_region
    _
  $region17: #{quantizable_model_forward.1} parent=0 // pred_fallthru
    _
  // Predicated region
  $region18: #{quantizable_model_forward.1} parent=0 // pred_check
    _
  $region19: #{quantizable_model_forward.1} parent=0 // pred_check_branch
    %21 = sbr.rel (0) target = $region21
  $region20: #{quantizable_model_forward.1} parent=0 // pred_region
    _
  $region21: #{quantizable_model_forward.1} parent=0 // pred_fallthru
    _
  // Predicated region
  $region22: #{quantizable_model_forward.1} parent=0 // pred_check
    _
  $region23: #{quantizable_model_forward.1} parent=0 // pred_check_branch
    %23 = sbr.rel (0) target = $region25
  $region24: #{quantizable_model_forward.1} parent=0 // pred_region
    _
  $region25: #{quantizable_model_forward.1} parent=0 // pred_fallthru
    _
  // Predicated region
  $region26: #{quantizable_model_forward.1} parent=0 // pred_check
    _
  $region27: #{quantizable_model_forward.1} parent=0 // pred_check_branch
    %25 = sbr.rel (0) target = $region29
  $region28: #{quantizable_model_forward.1} parent=0 // pred_region
    _
  $region29: #{quantizable_model_forward.1} parent=0 // pred_fallthru
    _
  %26 = vst [vmem:[#allocation2] sm:$0xff] 0.0
  %27 = vst [vmem:[#allocation2 + $0x8] sm:$0xff] 0.0
  %28 = vst [vmem:[#allocation2 + $0x10] sm:$0xff] 0.0
  %29 = vst [vmem:[#allocation2 + $0x18] sm:$0xff] 0.0
  %30 = vst [vmem:[#allocation3] sm:$0xff] 0.0
  %31 = vst [vmem:[#allocation3 + $0x8] sm:$0xff] 0.0
  %32 = vst [vmem:[#allocation3 + $0x10] sm:$0xff] 0.0
  %33 = vst [vmem:[#allocation3 + $0x18] sm:$0xff] 0.0
  %v34 = vlaneseq
  %v35 = vand.u32 %v34, 127
  %v36 = vadd.s32 %v35, 128
  %v37 = vand.u32 %v35, 15
  %v38 = vand.u32 %v36, 15
  %vm39 = vcmp.ge.s32.totalorder %v37, 1
  %vm40 = vcmp.ge.s32.totalorder %v38, 1
  %vm41 = vcmp.le.s32.totalorder %v37, 14
  %vm42 = vcmp.le.s32.totalorder %v38, 14
  %v43 = vld [vmem:[%s0] sm:$0xff]
  %v45 = vcombine.high %v43, %v43
  %47 = vst [vmem:[#allocation2 + $0x8] sm:$0xf] %v43
  %48 = vst [vmem:[#allocation2 + $0x10] sm:$0xf] %v45
  %v49 = vld [vmem:[#allocation2] sm:$0xff]
  %v50 = vld [vmem:[#allocation2 + $0x8] sm:$0xff]
  %v51 = vld [vmem:[#allocation2 + $0x10] sm:$0xff]
  %55 = vrot.lane.b32.xlu0 %v49, 17
  %v56 = vpop.permute.xlu0 %55
  %57 = vrot.lane.b32.xlu0 %v50, 17
  %v58 = vpop.permute.xlu0 %57
  %59 = vrot.lane.b32.xlu0 %v51, 17
  %v60 = vpop.permute.xlu0 %59
  %vm61 = vcmask 138240
  %v62 = vsel %vm61, %v56, %v58
  %v63 = vsel %vm61, %v58, %v60
  %v66 = vsel %vm39, %v62, 0.0
  %v67 = vsel %vm40, %v63, 0.0
  %68 = vrot.lane.b32.xlu0 %v49, 15
  %v69 = vpop.permute.xlu0 %68
  %70 = vrot.lane.b32.xlu0 %v50, 15
  %v71 = vpop.permute.xlu0 %70
  %72 = vrot.lane.b32.xlu0 %v51, 15
  %v73 = vpop.permute.xlu0 %72
  %vm74 = vcmask 121856
  %v75 = vsel %vm74, %v69, %v71
  %v76 = vsel %vm74, %v71, %v73
  %v79 = vsel %vm41, %v75, 0.0
  %v80 = vsel %vm42, %v76, 0.0
  %81 = vrot.lane.b32.xlu0 %v49, 1
  %v82 = vpop.permute.xlu0 %81
  %83 = vrot.lane.b32.xlu0 %v50, 1
  %v84 = vpop.permute.xlu0 %83
  %85 = vrot.lane.b32.xlu0 %v51, 1
  %v86 = vpop.permute.xlu0 %85
  %vm87 = vcmask 7168
  %v88 = vsel %vm87, %v82, %v84
  %v89 = vsel %vm87, %v84, %v86
  %v92 = vsel %vm39, %v88, 0.0
  %v93 = vsel %vm40, %v89, 0.0
  %v94 = vld [vmem:[#allocation2 + $0x8] sm:$0xff]
  %v95 = vld [vmem:[#allocation2 + $0x10] sm:$0xff]
  %v96 = vld [vmem:[#allocation2 + $0x18] sm:$0xff]
  %100 = vrot.lane.b32.xlu0 %v94, 127
  %v101 = vpop.permute.xlu0 %100
  %102 = vrot.lane.b32.xlu0 %v95, 127
  %v103 = vpop.permute.xlu0 %102
  %104 = vrot.lane.b32.xlu0 %v96, 127
  %v105 = vpop.permute.xlu0 %104
  %vm106 = vcmask 1039360
  %v107 = vsel %vm106, %v101, %v103
  %v108 = vsel %vm106, %v103, %v105
  %v111 = vsel %vm41, %v107, 0.0
  %v112 = vsel %vm42, %v108, 0.0
  %113 = vrot.lane.b32.xlu0 %v94, 113
  %v114 = vpop.permute.xlu0 %113
  %115 = vrot.lane.b32.xlu0 %v95, 113
  %v116 = vpop.permute.xlu0 %115
  %117 = vrot.lane.b32.xlu0 %v96, 113
  %v118 = vpop.permute.xlu0 %117
  %vm119 = vcmask 924672
  %v120 = vsel %vm119, %v114, %v116
  %v121 = vsel %vm119, %v116, %v118
  %v124 = vsel %vm39, %v120, 0.0
  %v125 = vsel %vm40, %v121, 0.0
  %126 = vrot.lane.b32.xlu0 %v94, 111
  %v127 = vpop.permute.xlu0 %126
  %128 = vrot.lane.b32.xlu0 %v95, 111
  %v129 = vpop.permute.xlu0 %128
  %130 = vrot.lane.b32.xlu0 %v96, 111
  %v131 = vpop.permute.xlu0 %130
  %vm132 = vcmask 908288
  %v133 = vsel %vm132, %v127, %v129
  %v134 = vsel %vm132, %v129, %v131
  %v137 = vsel %vm41, %v133, 0.0
  %v138 = vsel %vm42, %v134, 0.0
  %139 = vrot.lane.b32.xlu0 %v49, 16
  %v140 = vpop.permute.xlu0 %139
  %141 = vrot.lane.b32.xlu0 %v50, 16
  %v142 = vpop.permute.xlu0 %141
  %143 = vrot.lane.b32.xlu0 %v51, 16
  %v144 = vpop.permute.xlu0 %143
  %vm145 = vcmask 130048
  %v146 = vsel %vm145, %v140, %v142
  %v147 = vsel %vm145, %v142, %v144
  %150 = vrot.lane.b32.xlu0 %v94, 112
  %v151 = vpop.permute.xlu0 %150
  %152 = vrot.lane.b32.xlu0 %v95, 112
  %v153 = vpop.permute.xlu0 %152
  %154 = vrot.lane.b32.xlu0 %v96, 112
  %v155 = vpop.permute.xlu0 %154
  %vm156 = vcmask 916480
  %v157 = vsel %vm156, %v151, %v153
  %v158 = vsel %vm156, %v153, %v155
  %v161 = vld [vmem:[%s1] sm:$0xff]
  %v162 = vld [vmem:[%s2] sm:$0xff]
  %164 = vset.pattern.permute.xlu0 0
  %165 = vperm.xlu0 %164, %v162
  %v166 = vpop.permute.xlu0 %165
  %vm168 = vcmask 588800
  %v170 = vsel %vm168, %v161, 0
  %172 = vmatprep.subr.mxu0 %v67
  %173 = vmatpush1.msra.mxu0 %v66
  %174 = vmatprep.subr.mxu0 %v147
  %175 = vmatpush1.msra.mxu0 %v146
  %176 = vmatprep.subr.mxu0 %v80
  %177 = vmatpush1.msra.mxu0 %v79
  %178 = vmatprep.subr.mxu0 %v93
  %179 = vmatpush1.msra.mxu0 %v92
  %180 = vmatprep.subr.mxu0 %v51
  %181 = vmatpush1.msra.mxu0 %v50
  %182 = vmatprep.subr.mxu0 %v112
  %183 = vmatpush1.msra.mxu0 %v111
  %184 = vmatprep.subr.mxu0 %v125
  %185 = vmatpush1.msra.mxu0 %v124
  %186 = vmatprep.subr.mxu0 %v158
  %187 = vmatpush1.msra.mxu0 %v157
  %188 = vmatprep.subr.mxu0 %v138
  %189 = vmatpush1.msra.mxu0 %v137
  %190 = vmatprep.subr.mxu0 0.0
  %191 = vmatpush1.msra.mxu0 0.0
  %192 = vmatprep.subr.mxu0 0.0
  %193 = vmatpush1.msra.mxu0 0.0
  %194 = vmatprep.subr.mxu0 0.0
  %195 = vmatpush1.msra.mxu0 0.0
  %196 = vmatprep.subr.mxu0 0.0
  %197 = vmatpush1.msra.mxu0 0.0
  %198 = vmatprep.subr.mxu0 0.0
  %199 = vmatpush1.msra.mxu0 0.0
  %200 = vmatprep.subr.mxu0 0.0
  %201 = vmatpush1.msra.mxu0 0.0
  %202 = vmatprep.subr.mxu0 0.0
  %203 = vmatpush1.msra.mxu0 0.0
  %204 = vmatprep.subr.mxu0 0.0
  %205 = vmatpush1.msra.mxu0 0.0
  %206 = vmatprep.subr.mxu0 0.0
  %207 = vmatpush1.msra.mxu0 0.0
  %208 = vmatprep.subr.mxu0 0.0
  %209 = vmatpush1.msra.mxu0 0.0
  %210 = vmatprep.subr.mxu0 0.0
  %211 = vmatpush1.msra.mxu0 0.0
  %212 = vmatprep.subr.mxu0 0.0
  %213 = vmatpush1.msra.mxu0 0.0
  %214 = vmatprep.subr.mxu0 0.0
  %215 = vmatpush1.msra.mxu0 0.0
  %216 = vmatprep.subr.mxu0 0.0
  %217 = vmatpush1.msra.mxu0 0.0
  %218 = vmatprep.subr.mxu0 0.0
  %219 = vmatpush1.msra.mxu0 0.0
  %220 = vmatprep.subr.mxu0 0.0
  %221 = vmatpush1.msra.mxu0 0.0
  %222 = vmatprep.subr.mxu0 0.0
  %223 = vmatpush1.msra.mxu0 0.0
  %224 = vmatprep.subr.mxu0 0.0
  %225 = vmatpush1.msra.mxu0 0.0
  %226 = vmatprep.subr.mxu0 0.0
  %227 = vmatpush1.msra.mxu0 0.0
  %228 = vmatprep.subr.mxu0 0.0
  %229 = vmatpush1.msra.mxu0 0.0
  %230 = vmatprep.subr.mxu0 0.0
  %231 = vmatpush1.msra.mxu0 0.0
  %232 = vmatprep.subr.mxu0 0.0
  %233 = vmatpush1.msra.mxu0 0.0
  %234 = vmatprep.subr.mxu0 0.0
  %235 = vmatpush1.msra.mxu0 0.0
  %236 = vmatprep.mubr.f32.mxu0 0.0
  %237 = vmatmul.mubr.f32.gmra.mrb[0].mxu0 %v170
  %v238 = vpop.f32.mrb[0].mxu0
  %v239 = vadd.f32 %v166, %v238
  %v240 = vpop.f32.mrb[0].mxu0
  %v241 = vadd.f32 %v166, %v240
  %242 = vdwg.mxu0
  %v243 = vmax.f32 %v239, 0.0
  %v244 = vmax.f32 %v241, 0.0
  %245 = vst [vmem:[#allocation3 + $0x8] sm:$0xff] %v243
  %246 = vst [vmem:[#allocation3 + $0x10] sm:$0xff] %v244
  %v247 = vld [vmem:[#allocation3] sm:$0xff]
  %v248 = vld [vmem:[#allocation3 + $0x8] sm:$0xff]
  %v249 = vld [vmem:[#allocation3 + $0x10] sm:$0xff]
  %253 = vrot.lane.b32.xlu0 %v247, 17
  %v254 = vpop.permute.xlu0 %253
  %255 = vrot.lane.b32.xlu0 %v248, 17
  %v256 = vpop.permute.xlu0 %255
  %257 = vrot.lane.b32.xlu0 %v249, 17
  %v258 = vpop.permute.xlu0 %257
  %v259 = vsel %vm61, %v254, %v256
  %v260 = vsel %vm61, %v256, %v258
  %v263 = vsel %vm39, %v259, 0.0
  %v264 = vsel %vm40, %v260, 0.0
  %v265 = vld [vmem:[%s3] sm:$0xff]
  %267 = vset.pattern.permute.xlu0 0
  %268 = vperm.xlu0 %267, %v265
  %v269 = vpop.permute.xlu0 %268
  %v271 = vmul.f32 %v263, %v269
  %v272 = vmul.f32 %v264, %v269
  %v273 = vadd.f32 %v271, 0.0
  %v274 = vadd.f32 %v272, 0.0
  %275 = vset.pattern.permute.xlu0 1
  %276 = vperm.xlu0 %275, %v265
  %v277 = vpop.permute.xlu0 %276
  %v279 = vmul.f32 %v247, %v277
  %v280 = vmul.f32 %v248, %v277
  %v281 = vmul.f32 %v249, %v277
  %285 = vrot.lane.b32.xlu0 %v279, 16
  %v286 = vpop.permute.xlu0 %285
  %287 = vrot.lane.b32.xlu0 %v280, 16
  %v288 = vpop.permute.xlu0 %287
  %289 = vrot.lane.b32.xlu0 %v281, 16
  %v290 = vpop.permute.xlu0 %289
  %v291 = vsel %vm145, %v286, %v288
  %v292 = vsel %vm145, %v288, %v290
  %v295 = vadd.f32 %v273, %v291
  %v296 = vadd.f32 %v274, %v292
  %297 = vrot.lane.b32.xlu0 %v247, 15
  %v298 = vpop.permute.xlu0 %297
  %299 = vrot.lane.b32.xlu0 %v248, 15
  %v300 = vpop.permute.xlu0 %299
  %301 = vrot.lane.b32.xlu0 %v249, 15
  %v302 = vpop.permute.xlu0 %301
  %v303 = vsel %vm74, %v298, %v300
  %v304 = vsel %vm74, %v300, %v302
  %v307 = vsel %vm41, %v303, 0.0
  %v308 = vsel %vm42, %v304, 0.0
  %309 = vset.pattern.permute.xlu0 2
  %310 = vperm.xlu0 %309, %v265
  %v311 = vpop.permute.xlu0 %310
  %v313 = vmul.f32 %v307, %v311
  %v314 = vmul.f32 %v308, %v311
  %v315 = vadd.f32 %v295, %v313
  %v316 = vadd.f32 %v296, %v314
  %317 = vrot.lane.b32.xlu0 %v247, 1
  %v318 = vpop.permute.xlu0 %317
  %319 = vrot.lane.b32.xlu0 %v248, 1
  %v320 = vpop.permute.xlu0 %319
  %321 = vrot.lane.b32.xlu0 %v249, 1
  %v322 = vpop.permute.xlu0 %321
  %v323 = vsel %vm87, %v318, %v320
  %v324 = vsel %vm87, %v320, %v322
  %v327 = vsel %vm39, %v323, 0.0
  %v328 = vsel %vm40, %v324, 0.0
  %329 = vset.pattern.permute.xlu0 3
  %330 = vperm.xlu0 %329, %v265
  %v331 = vpop.permute.xlu0 %330
  %v333 = vmul.f32 %v327, %v331
  %v334 = vmul.f32 %v328, %v331
  %v335 = vadd.f32 %v315, %v333
  %v336 = vadd.f32 %v316, %v334
  %337 = vset.pattern.permute.xlu0 4
  %338 = vperm.xlu0 %337, %v265
  %v339 = vpop.permute.xlu0 %338
  %v341 = vmul.f32 %v248, %v339
  %v342 = vmul.f32 %v249, %v339
  %v343 = vadd.f32 %v335, %v341
  %v344 = vadd.f32 %v336, %v342
  %v345 = vld [vmem:[#allocation3 + $0x8] sm:$0xff]
  %v346 = vld [vmem:[#allocation3 + $0x10] sm:$0xff]
  %v347 = vld [vmem:[#allocation3 + $0x18] sm:$0xff]
  %351 = vrot.lane.b32.xlu0 %v345, 127
  %v352 = vpop.permute.xlu0 %351
  %353 = vrot.lane.b32.xlu0 %v346, 127
  %v354 = vpop.permute.xlu0 %353
  %355 = vrot.lane.b32.xlu0 %v347, 127
  %v356 = vpop.permute.xlu0 %355
  %v357 = vsel %vm106, %v352, %v354
  %v358 = vsel %vm106, %v354, %v356
  %v361 = vsel %vm41, %v357, 0.0
  %v362 = vsel %vm42, %v358, 0.0
  %363 = vset.pattern.permute.xlu0 5
  %364 = vperm.xlu0 %363, %v265
  %v365 = vpop.permute.xlu0 %364
  %v367 = vmul.f32 %v361, %v365
  %v368 = vmul.f32 %v362, %v365
  %v369 = vadd.f32 %v343, %v367
  %v370 = vadd.f32 %v344, %v368
  %371 = vrot.lane.b32.xlu0 %v345, 113
  %v372 = vpop.permute.xlu0 %371
  %373 = vrot.lane.b32.xlu0 %v346, 113
  %v374 = vpop.permute.xlu0 %373
  %375 = vrot.lane.b32.xlu0 %v347, 113
  %v376 = vpop.permute.xlu0 %375
  %v377 = vsel %vm119, %v372, %v374
  %v378 = vsel %vm119, %v374, %v376
  %v381 = vsel %vm39, %v377, 0.0
  %v382 = vsel %vm40, %v378, 0.0
  %383 = vset.pattern.permute.xlu0 6
  %384 = vperm.xlu0 %383, %v265
  %v385 = vpop.permute.xlu0 %384
  %v387 = vmul.f32 %v381, %v385
  %v388 = vmul.f32 %v382, %v385
  %v389 = vadd.f32 %v369, %v387
  %v390 = vadd.f32 %v370, %v388
  %391 = vset.pattern.permute.xlu0 7
  %392 = vperm.xlu0 %391, %v265
  %v393 = vpop.permute.xlu0 %392
  %v395 = vmul.f32 %v345, %v393
  %v396 = vmul.f32 %v346, %v393
  %v397 = vmul.f32 %v347, %v393
  %401 = vrot.lane.b32.xlu0 %v395, 112
  %v402 = vpop.permute.xlu0 %401
  %403 = vrot.lane.b32.xlu0 %v396, 112
  %v404 = vpop.permute.xlu0 %403
  %405 = vrot.lane.b32.xlu0 %v397, 112
  %v406 = vpop.permute.xlu0 %405
  %v407 = vsel %vm156, %v402, %v404
  %v408 = vsel %vm156, %v404, %v406
  %v411 = vadd.f32 %v389, %v407
  %v412 = vadd.f32 %v390, %v408
  %413 = vrot.lane.b32.xlu0 %v345, 111
  %v414 = vpop.permute.xlu0 %413
  %415 = vrot.lane.b32.xlu0 %v346, 111
  %v416 = vpop.permute.xlu0 %415
  %417 = vrot.lane.b32.xlu0 %v347, 111
  %v418 = vpop.permute.xlu0 %417
  %v419 = vsel %vm132, %v414, %v416
  %v420 = vsel %vm132, %v416, %v418
  %v423 = vsel %vm41, %v419, 0.0
  %v424 = vsel %vm42, %v420, 0.0
  %425 = vset.pattern.permute.xlu0 8
  %426 = vperm.xlu0 %425, %v265
  %v427 = vpop.permute.xlu0 %426
  %v429 = vmul.f32 %v423, %v427
  %v430 = vmul.f32 %v424, %v427
  %v431 = vadd.f32 %v411, %v429
  %v432 = vadd.f32 %v412, %v430
  %v433 = vld [vmem:[%s4] sm:$0xff]
  %435 = vset.pattern.permute.xlu0 0
  %436 = vperm.xlu0 %435, %v433
  %v437 = vpop.permute.xlu0 %436
  %v439 = vadd.f32 %v431, %v437
  %v440 = vadd.f32 %v432, %v437
  %v441 = vmax.f32 %v439, 0.0
  %v442 = vmax.f32 %v440, 0.0
  %v443 = vld [vmem:[%s5] sm:$0xff]
  %v444 = vld [vmem:[%s5 + $0x8] sm:$0xff]
  %v445 = vld [vmem:[%s6] sm:$0xff]
  %v446 = vld [vmem:[%s6 + $0x8] sm:$0xff]
  %448 = vset.pattern.permute.xlu0 0
  %449 = vperm.xlu0 %448, %v445
  %v450 = vpop.permute.xlu0 %449
  %453 = vset.pattern.permute.xlu0 0
  %454 = vperm.xlu0 %453, %v446
  %v455 = vpop.permute.xlu0 %454
  %vm457 = vcmask 64512
  %v459 = vsel %vm457, %v443, 0
  %v462 = vsel %vm457, %v444, 0
  %464 = vmatprep.subr.mxu0 %v442
  %465 = vmatpush1.msra.mxu0 %v441
  %466 = vmatprep.subr.mxu0 0.0
  %467 = vmatpush1.msra.mxu0 0.0
  %468 = vmatprep.subr.mxu0 0.0
  %469 = vmatpush1.msra.mxu0 0.0
  %470 = vmatprep.subr.mxu0 0.0
  %471 = vmatpush1.msra.mxu0 0.0
  %472 = vmatprep.subr.mxu0 0.0
  %473 = vmatpush1.msra.mxu0 0.0
  %474 = vmatprep.subr.mxu0 0.0
  %475 = vmatpush1.msra.mxu0 0.0
  %476 = vmatprep.subr.mxu0 0.0
  %477 = vmatpush1.msra.mxu0 0.0
  %478 = vmatprep.subr.mxu0 0.0
  %479 = vmatpush1.msra.mxu0 0.0
  %480 = vmatprep.subr.mxu0 0.0
  %481 = vmatpush1.msra.mxu0 0.0
  %482 = vmatprep.subr.mxu0 0.0
  %483 = vmatpush1.msra.mxu0 0.0
  %484 = vmatprep.subr.mxu0 0.0
  %485 = vmatpush1.msra.mxu0 0.0
  %486 = vmatprep.subr.mxu0 0.0
  %487 = vmatpush1.msra.mxu0 0.0
  %488 = vmatprep.subr.mxu0 0.0
  %489 = vmatpush1.msra.mxu0 0.0
  %490 = vmatprep.subr.mxu0 0.0
  %491 = vmatpush1.msra.mxu0 0.0
  %492 = vmatprep.subr.mxu0 0.0
  %493 = vmatpush1.msra.mxu0 0.0
  %494 = vmatprep.subr.mxu0 0.0
  %495 = vmatpush1.msra.mxu0 0.0
  %496 = vmatprep.subr.mxu0 0.0
  %497 = vmatpush1.msra.mxu0 0.0
  %498 = vmatprep.subr.mxu0 0.0
  %499 = vmatpush1.msra.mxu0 0.0
  %500 = vmatprep.subr.mxu0 0.0
  %501 = vmatpush1.msra.mxu0 0.0
  %502 = vmatprep.subr.mxu0 0.0
  %503 = vmatpush1.msra.mxu0 0.0
  %504 = vmatprep.subr.mxu0 0.0
  %505 = vmatpush1.msra.mxu0 0.0
  %506 = vmatprep.subr.mxu0 0.0
  %507 = vmatpush1.msra.mxu0 0.0
  %508 = vmatprep.subr.mxu0 0.0
  %509 = vmatpush1.msra.mxu0 0.0
  %510 = vmatprep.subr.mxu0 0.0
  %511 = vmatpush1.msra.mxu0 0.0
  %512 = vmatprep.subr.mxu0 0.0
  %513 = vmatpush1.msra.mxu0 0.0
  %514 = vmatprep.subr.mxu0 0.0
  %515 = vmatpush1.msra.mxu0 0.0
  %516 = vmatprep.subr.mxu0 0.0
  %517 = vmatpush1.msra.mxu0 0.0
  %518 = vmatprep.subr.mxu0 0.0
  %519 = vmatpush1.msra.mxu0 0.0
  %520 = vmatprep.subr.mxu0 0.0
  %521 = vmatpush1.msra.mxu0 0.0
  %522 = vmatprep.subr.mxu0 0.0
  %523 = vmatpush1.msra.mxu0 0.0
  %524 = vmatprep.subr.mxu0 0.0
  %525 = vmatpush1.msra.mxu0 0.0
  %526 = vmatprep.subr.mxu0 0.0
  %527 = vmatpush1.msra.mxu0 0.0
  %528 = vmatprep.mubr.f32.mxu0 0.0
  %529 = vmatmul.mubr.f32.gmra.mrb[0].mxu0 %v459
  %v530 = vpop.f32.mrb[0].mxu0
  %v531 = vadd.f32 %v450, %v530
  %v532 = vpop.f32.mrb[0].mxu0
  %v533 = vadd.f32 %v450, %v532
  %534 = vmatprep.mubr.f32.mxu0 0.0
  %535 = vmatmul.mubr.f32.gmra.mrb[0].mxu0 %v462
  %v536 = vpop.f32.mrb[0].mxu0
  %v537 = vadd.f32 %v455, %v536
  %v538 = vpop.f32.mrb[0].mxu0
  %v539 = vadd.f32 %v455, %v538
  %540 = vdwg.mxu0
  %v541 = vmax.f32 %v531, 0.0
  %v542 = vmax.f32 %v533, 0.0
  %v543 = vmax.f32 %v537, 0.0
  %v544 = vmax.f32 %v539, 0.0
  %545 = vst [vmem:[%s7] sm:$0xff] %v541
  %546 = vst [vmem:[%s7 + $0x8] sm:$0xff] %v542
  %547 = vst [vmem:[%s7 + $0x10] sm:$0xff] %v543
  %548 = vst [vmem:[%s7 + $0x18] sm:$0xff] %v544
  %s549 = scalar_lea.vmem %s0, 8
  %v550 = vld [vmem:[%s549] sm:$0xff]
  %v552 = vcombine.high %v550, %v550
  %554 = vst [vmem:[#allocation2 + $0x8] sm:$0xf] %v550
  %555 = vst [vmem:[#allocation2 + $0x10] sm:$0xf] %v552
  %v556 = vld [vmem:[#allocation2] sm:$0xff]
  %v557 = vld [vmem:[#allocation2 + $0x8] sm:$0xff]
  %v558 = vld [vmem:[#allocation2 + $0x10] sm:$0xff]
  %562 = vrot.lane.b32.xlu0 %v556, 17
  %v563 = vpop.permute.xlu0 %562
  %564 = vrot.lane.b32.xlu0 %v557, 17
  %v565 = vpop.permute.xlu0 %564
  %566 = vrot.lane.b32.xlu0 %v558, 17
  %v567 = vpop.permute.xlu0 %566
  %v568 = vsel %vm61, %v563, %v565
  %v569 = vsel %vm61, %v565, %v567
  %v572 = vsel %vm39, %v568, 0.0
  %v573 = vsel %vm40, %v569, 0.0
  %574 = vrot.lane.b32.xlu0 %v556, 15
  %v575 = vpop.permute.xlu0 %574
  %576 = vrot.lane.b32.xlu0 %v557, 15
  %v577 = vpop.permute.xlu0 %576
  %578 = vrot.lane.b32.xlu0 %v558, 15
  %v579 = vpop.permute.xlu0 %578
  %v580 = vsel %vm74, %v575, %v577
  %v581 = vsel %vm74, %v577, %v579
  %v584 = vsel %vm41, %v580, 0.0
  %v585 = vsel %vm42, %v581, 0.0
  %586 = vrot.lane.b32.xlu0 %v556, 1
  %v587 = vpop.permute.xlu0 %586
  %588 = vrot.lane.b32.xlu0 %v557, 1
  %v589 = vpop.permute.xlu0 %588
  %590 = vrot.lane.b32.xlu0 %v558, 1
  %v591 = vpop.permute.xlu0 %590
  %v592 = vsel %vm87, %v587, %v589
  %v593 = vsel %vm87, %v589, %v591
  %v596 = vsel %vm39, %v592, 0.0
  %v597 = vsel %vm40, %v593, 0.0
  %v598 = vld [vmem:[#allocation2 + $0x8] sm:$0xff]
  %v599 = vld [vmem:[#allocation2 + $0x10] sm:$0xff]
  %v600 = vld [vmem:[#allocation2 + $0x18] sm:$0xff]
  %604 = vrot.lane.b32.xlu0 %v598, 127
  %v605 = vpop.permute.xlu0 %604
  %606 = vrot.lane.b32.xlu0 %v599, 127
  %v607 = vpop.permute.xlu0 %606
  %608 = vrot.lane.b32.xlu0 %v600, 127
  %v609 = vpop.permute.xlu0 %608
  %v610 = vsel %vm106, %v605, %v607
  %v611 = vsel %vm106, %v607, %v609
  %v614 = vsel %vm41, %v610, 0.0
  %v615 = vsel %vm42, %v611, 0.0
  %616 = vrot.lane.b32.xlu0 %v598, 113
  %v617 = vpop.permute.xlu0 %616
  %618 = vrot.lane.b32.xlu0 %v599, 113
  %v619 = vpop.permute.xlu0 %618
  %620 = vrot.lane.b32.xlu0 %v600, 113
  %v621 = vpop.permute.xlu0 %620
  %v622 = vsel %vm119, %v617, %v619
  %v623 = vsel %vm119, %v619, %v621
  %v626 = vsel %vm39, %v622, 0.0
  %v627 = vsel %vm40, %v623, 0.0
  %628 = vrot.lane.b32.xlu0 %v598, 111
  %v629 = vpop.permute.xlu0 %628
  %630 = vrot.lane.b32.xlu0 %v599, 111
  %v631 = vpop.permute.xlu0 %630
  %632 = vrot.lane.b32.xlu0 %v600, 111
  %v633 = vpop.permute.xlu0 %632
  %v634 = vsel %vm132, %v629, %v631
  %v635 = vsel %vm132, %v631, %v633
  %v638 = vsel %vm41, %v634, 0.0
  %v639 = vsel %vm42, %v635, 0.0
  %640 = vrot.lane.b32.xlu0 %v556, 16
  %v641 = vpop.permute.xlu0 %640
  %642 = vrot.lane.b32.xlu0 %v557, 16
  %v643 = vpop.permute.xlu0 %642
  %644 = vrot.lane.b32.xlu0 %v558, 16
  %v645 = vpop.permute.xlu0 %644
  %v646 = vsel %vm145, %v641, %v643
  %v647 = vsel %vm145, %v643, %v645
  %650 = vrot.lane.b32.xlu0 %v598, 112
  %v651 = vpop.permute.xlu0 %650
  %652 = vrot.lane.b32.xlu0 %v599, 112
  %v653 = vpop.permute.xlu0 %652
  %654 = vrot.lane.b32.xlu0 %v600, 112
  %v655 = vpop.permute.xlu0 %654
  %v656 = vsel %vm156, %v651, %v653
  %v657 = vsel %vm156, %v653, %v655
  %v660 = vld [vmem:[%s1] sm:$0xff]
  %v661 = vld [vmem:[%s2] sm:$0xff]
  %663 = vset.pattern.permute.xlu0 0
  %664 = vperm.xlu0 %663, %v661
  %v665 = vpop.permute.xlu0 %664
  %v668 = vsel %vm168, %v660, 0
  %670 = vmatprep.subr.mxu0 %v573
  %671 = vmatpush1.msra.mxu0 %v572
  %672 = vmatprep.subr.mxu0 %v647
  %673 = vmatpush1.msra.mxu0 %v646
  %674 = vmatprep.subr.mxu0 %v585
  %675 = vmatpush1.msra.mxu0 %v584
  %676 = vmatprep.subr.mxu0 %v597
  %677 = vmatpush1.msra.mxu0 %v596
  %678 = vmatprep.subr.mxu0 %v558
  %679 = vmatpush1.msra.mxu0 %v557
  %680 = vmatprep.subr.mxu0 %v615
  %681 = vmatpush1.msra.mxu0 %v614
  %682 = vmatprep.subr.mxu0 %v627
  %683 = vmatpush1.msra.mxu0 %v626
  %684 = vmatprep.subr.mxu0 %v657
  %685 = vmatpush1.msra.mxu0 %v656
  %686 = vmatprep.subr.mxu0 %v639
  %687 = vmatpush1.msra.mxu0 %v638
  %688 = vmatprep.subr.mxu0 0.0
  %689 = vmatpush1.msra.mxu0 0.0
  %690 = vmatprep.subr.mxu0 0.0
  %691 = vmatpush1.msra.mxu0 0.0
  %692 = vmatprep.subr.mxu0 0.0
  %693 = vmatpush1.msra.mxu0 0.0
  %694 = vmatprep.subr.mxu0 0.0
  %695 = vmatpush1.msra.mxu0 0.0
  %696 = vmatprep.subr.mxu0 0.0
  %697 = vmatpush1.msra.mxu0 0.0
  %698 = vmatprep.subr.mxu0 0.0
  %699 = vmatpush1.msra.mxu0 0.0
  %700 = vmatprep.subr.mxu0 0.0
  %701 = vmatpush1.msra.mxu0 0.0
  %702 = vmatprep.subr.mxu0 0.0
  %703 = vmatpush1.msra.mxu0 0.0
  %704 = vmatprep.subr.mxu0 0.0
  %705 = vmatpush1.msra.mxu0 0.0
  %706 = vmatprep.subr.mxu0 0.0
  %707 = vmatpush1.msra.mxu0 0.0
  %708 = vmatprep.subr.mxu0 0.0
  %709 = vmatpush1.msra.mxu0 0.0
  %710 = vmatprep.subr.mxu0 0.0
  %711 = vmatpush1.msra.mxu0 0.0
  %712 = vmatprep.subr.mxu0 0.0
  %713 = vmatpush1.msra.mxu0 0.0
  %714 = vmatprep.subr.mxu0 0.0
  %715 = vmatpush1.msra.mxu0 0.0
  %716 = vmatprep.subr.mxu0 0.0
  %717 = vmatpush1.msra.mxu0 0.0
  %718 = vmatprep.subr.mxu0 0.0
  %719 = vmatpush1.msra.mxu0 0.0
  %720 = vmatprep.subr.mxu0 0.0
  %721 = vmatpush1.msra.mxu0 0.0
  %722 = vmatprep.subr.mxu0 0.0
  %723 = vmatpush1.msra.mxu0 0.0
  %724 = vmatprep.subr.mxu0 0.0
  %725 = vmatpush1.msra.mxu0 0.0
  %726 = vmatprep.subr.mxu0 0.0
  %727 = vmatpush1.msra.mxu0 0.0
  %728 = vmatprep.subr.mxu0 0.0
  %729 = vmatpush1.msra.mxu0 0.0
  %730 = vmatprep.subr.mxu0 0.0
  %731 = vmatpush1.msra.mxu0 0.0
  %732 = vmatprep.subr.mxu0 0.0
  %733 = vmatpush1.msra.mxu0 0.0
  %734 = vmatprep.mubr.f32.mxu0 0.0
  %735 = vmatmul.mubr.f32.gmra.mrb[0].mxu0 %v668
  %v736 = vpop.f32.mrb[0].mxu0
  %v737 = vadd.f32 %v665, %v736
  %v738 = vpop.f32.mrb[0].mxu0
  %v739 = vadd.f32 %v665, %v738
  %740 = vdwg.mxu0
  %v741 = vmax.f32 %v737, 0.0
  %v742 = vmax.f32 %v739, 0.0
  %743 = vst [vmem:[#allocation3 + $0x8] sm:$0xff] %v741
  %744 = vst [vmem:[#allocation3 + $0x10] sm:$0xff] %v742
  %v745 = vld [vmem:[#allocation3] sm:$0xff]
  %v746 = vld [vmem:[#allocation3 + $0x8] sm:$0xff]
  %v747 = vld [vmem:[#allocation3 + $0x10] sm:$0xff]
  %751 = vrot.lane.b32.xlu0 %v745, 17
  %v752 = vpop.permute.xlu0 %751
  %753 = vrot.lane.b32.xlu0 %v746, 17
  %v754 = vpop.permute.xlu0 %753
  %755 = vrot.lane.b32.xlu0 %v747, 17
  %v756 = vpop.permute.xlu0 %755
  %v757 = vsel %vm61, %v752, %v754
  %v758 = vsel %vm61, %v754, %v756
  %v761 = vsel %vm39, %v757, 0.0
  %v762 = vsel %vm40, %v758, 0.0
  %v763 = vld [vmem:[%s3] sm:$0xff]
  %765 = vset.pattern.permute.xlu0 0
  %766 = vperm.xlu0 %765, %v763
  %v767 = vpop.permute.xlu0 %766
  %v769 = vmul.f32 %v761, %v767
  %v770 = vmul.f32 %v762, %v767
  %v771 = vadd.f32 %v769, 0.0
  %v772 = vadd.f32 %v770, 0.0
  %773 = vset.pattern.permute.xlu0 1
  %774 = vperm.xlu0 %773, %v763
  %v775 = vpop.permute.xlu0 %774
  %v777 = vmul.f32 %v745, %v775
  %v778 = vmul.f32 %v746, %v775
  %v779 = vmul.f32 %v747, %v775
  %783 = vrot.lane.b32.xlu0 %v777, 16
  %v784 = vpop.permute.xlu0 %783
  %785 = vrot.lane.b32.xlu0 %v778, 16
  %v786 = vpop.permute.xlu0 %785
  %787 = vrot.lane.b32.xlu0 %v779, 16
  %v788 = vpop.permute.xlu0 %787
  %v789 = vsel %vm145, %v784, %v786
  %v790 = vsel %vm145, %v786, %v788
  %v793 = vadd.f32 %v771, %v789
  %v794 = vadd.f32 %v772, %v790
  %795 = vrot.lane.b32.xlu0 %v745, 15
  %v796 = vpop.permute.xlu0 %795
  %797 = vrot.lane.b32.xlu0 %v746, 15
  %v798 = vpop.permute.xlu0 %797
  %799 = vrot.lane.b32.xlu0 %v747, 15
  %v800 = vpop.permute.xlu0 %799
  %v801 = vsel %vm74, %v796, %v798
  %v802 = vsel %vm74, %v798, %v800
  %v805 = vsel %vm41, %v801, 0.0
  %v806 = vsel %vm42, %v802, 0.0
  %807 = vset.pattern.permute.xlu0 2
  %808 = vperm.xlu0 %807, %v763
  %v809 = vpop.permute.xlu0 %808
  %v811 = vmul.f32 %v805, %v809
  %v812 = vmul.f32 %v806, %v809
  %v813 = vadd.f32 %v793, %v811
  %v814 = vadd.f32 %v794, %v812
  %815 = vrot.lane.b32.xlu0 %v745, 1
  %v816 = vpop.permute.xlu0 %815
  %817 = vrot.lane.b32.xlu0 %v746, 1
  %v818 = vpop.permute.xlu0 %817
  %819 = vrot.lane.b32.xlu0 %v747, 1
  %v820 = vpop.permute.xlu0 %819
  %v821 = vsel %vm87, %v816, %v818
  %v822 = vsel %vm87, %v818, %v820
  %v825 = vsel %vm39, %v821, 0.0
  %v826 = vsel %vm40, %v822, 0.0
  %827 = vset.pattern.permute.xlu0 3
  %828 = vperm.xlu0 %827, %v763
  %v829 = vpop.permute.xlu0 %828
  %v831 = vmul.f32 %v825, %v829
  %v832 = vmul.f32 %v826, %v829
  %v833 = vadd.f32 %v813, %v831
  %v834 = vadd.f32 %v814, %v832
  %835 = vset.pattern.permute.xlu0 4
  %836 = vperm.xlu0 %835, %v763
  %v837 = vpop.permute.xlu0 %836
  %v839 = vmul.f32 %v746, %v837
  %v840 = vmul.f32 %v747, %v837
  %v841 = vadd.f32 %v833, %v839
  %v842 = vadd.f32 %v834, %v840
  %v843 = vld [vmem:[#allocation3 + $0x8] sm:$0xff]
  %v844 = vld [vmem:[#allocation3 + $0x10] sm:$0xff]
  %v845 = vld [vmem:[#allocation3 + $0x18] sm:$0xff]
  %849 = vrot.lane.b32.xlu0 %v843, 127
  %v850 = vpop.permute.xlu0 %849
  %851 = vrot.lane.b32.xlu0 %v844, 127
  %v852 = vpop.permute.xlu0 %851
  %853 = vrot.lane.b32.xlu0 %v845, 127
  %v854 = vpop.permute.xlu0 %853
  %v855 = vsel %vm106, %v850, %v852
  %v856 = vsel %vm106, %v852, %v854
  %v859 = vsel %vm41, %v855, 0.0
  %v860 = vsel %vm42, %v856, 0.0
  %861 = vset.pattern.permute.xlu0 5
  %862 = vperm.xlu0 %861, %v763
  %v863 = vpop.permute.xlu0 %862
  %v865 = vmul.f32 %v859, %v863
  %v866 = vmul.f32 %v860, %v863
  %v867 = vadd.f32 %v841, %v865
  %v868 = vadd.f32 %v842, %v866
  %869 = vrot.lane.b32.xlu0 %v843, 113
  %v870 = vpop.permute.xlu0 %869
  %871 = vrot.lane.b32.xlu0 %v844, 113
  %v872 = vpop.permute.xlu0 %871
  %873 = vrot.lane.b32.xlu0 %v845, 113
  %v874 = vpop.permute.xlu0 %873
  %v875 = vsel %vm119, %v870, %v872
  %v876 = vsel %vm119, %v872, %v874
  %v879 = vsel %vm39, %v875, 0.0
  %v880 = vsel %vm40, %v876, 0.0
  %881 = vset.pattern.permute.xlu0 6
  %882 = vperm.xlu0 %881, %v763
  %v883 = vpop.permute.xlu0 %882
  %v885 = vmul.f32 %v879, %v883
  %v886 = vmul.f32 %v880, %v883
  %v887 = vadd.f32 %v867, %v885
  %v888 = vadd.f32 %v868, %v886
  %889 = vset.pattern.permute.xlu0 7
  %890 = vperm.xlu0 %889, %v763
  %v891 = vpop.permute.xlu0 %890
  %v893 = vmul.f32 %v843, %v891
  %v894 = vmul.f32 %v844, %v891
  %v895 = vmul.f32 %v845, %v891
  %899 = vrot.lane.b32.xlu0 %v893, 112
  %v900 = vpop.permute.xlu0 %899
  %901 = vrot.lane.b32.xlu0 %v894, 112
  %v902 = vpop.permute.xlu0 %901
  %903 = vrot.lane.b32.xlu0 %v895, 112
  %v904 = vpop.permute.xlu0 %903
  %v905 = vsel %vm156, %v900, %v902
  %v906 = vsel %vm156, %v902, %v904
  %v909 = vadd.f32 %v887, %v905
  %v910 = vadd.f32 %v888, %v906
  %911 = vrot.lane.b32.xlu0 %v843, 111
  %v912 = vpop.permute.xlu0 %911
  %913 = vrot.lane.b32.xlu0 %v844, 111
  %v914 = vpop.permute.xlu0 %913
  %915 = vrot.lane.b32.xlu0 %v845, 111
  %v916 = vpop.permute.xlu0 %915
  %v917 = vsel %vm132, %v912, %v914
  %v918 = vsel %vm132, %v914, %v916
  %v921 = vsel %vm41, %v917, 0.0
  %v922 = vsel %vm42, %v918, 0.0
  %923 = vset.pattern.permute.xlu0 8
  %924 = vperm.xlu0 %923, %v763
  %v925 = vpop.permute.xlu0 %924
  %v927 = vmul.f32 %v921, %v925
  %v928 = vmul.f32 %v922, %v925
  %v929 = vadd.f32 %v909, %v927
  %v930 = vadd.f32 %v910, %v928
  %v931 = vld [vmem:[%s4] sm:$0xff]
  %933 = vset.pattern.permute.xlu0 0
  %934 = vperm.xlu0 %933, %v931
  %v935 = vpop.permute.xlu0 %934
  %v937 = vadd.f32 %v929, %v935
  %v938 = vadd.f32 %v930, %v935
  %v939 = vmax.f32 %v937, 0.0
  %v940 = vmax.f32 %v938, 0.0
  %v941 = vld [vmem:[%s5] sm:$0xff]
  %v942 = vld [vmem:[%s5 + $0x8] sm:$0xff]
  %v943 = vld [vmem:[%s6] sm:$0xff]
  %v944 = vld [vmem:[%s6 + $0x8] sm:$0xff]
  %946 = vset.pattern.permute.xlu0 0
  %947 = vperm.xlu0 %946, %v943
  %v948 = vpop.permute.xlu0 %947
  %951 = vset.pattern.permute.xlu0 0
  %952 = vperm.xlu0 %951, %v944
  %v953 = vpop.permute.xlu0 %952
  %v956 = vsel %vm457, %v941, 0
  %v959 = vsel %vm457, %v942, 0
  %961 = vmatprep.subr.mxu0 %v940
  %962 = vmatpush1.msra.mxu0 %v939
  %963 = vmatprep.subr.mxu0 0.0
  %964 = vmatpush1.msra.mxu0 0.0
  %965 = vmatprep.subr.mxu0 0.0
  %966 = vmatpush1.msra.mxu0 0.0
  %967 = vmatprep.subr.mxu0 0.0
  %968 = vmatpush1.msra.mxu0 0.0
  %969 = vmatprep.subr.mxu0 0.0
  %970 = vmatpush1.msra.mxu0 0.0
  %971 = vmatprep.subr.mxu0 0.0
  %972 = vmatpush1.msra.mxu0 0.0
  %973 = vmatprep.subr.mxu0 0.0
  %974 = vmatpush1.msra.mxu0 0.0
  %975 = vmatprep.subr.mxu0 0.0
  %976 = vmatpush1.msra.mxu0 0.0
  %977 = vmatprep.subr.mxu0 0.0
  %978 = vmatpush1.msra.mxu0 0.0
  %979 = vmatprep.subr.mxu0 0.0
  %980 = vmatpush1.msra.mxu0 0.0
  %981 = vmatprep.subr.mxu0 0.0
  %982 = vmatpush1.msra.mxu0 0.0
  %983 = vmatprep.subr.mxu0 0.0
  %984 = vmatpush1.msra.mxu0 0.0
  %985 = vmatprep.subr.mxu0 0.0
  %986 = vmatpush1.msra.mxu0 0.0
  %987 = vmatprep.subr.mxu0 0.0
  %988 = vmatpush1.msra.mxu0 0.0
  %989 = vmatprep.subr.mxu0 0.0
  %990 = vmatpush1.msra.mxu0 0.0
  %991 = vmatprep.subr.mxu0 0.0
  %992 = vmatpush1.msra.mxu0 0.0
  %993 = vmatprep.subr.mxu0 0.0
  %994 = vmatpush1.msra.mxu0 0.0
  %995 = vmatprep.subr.mxu0 0.0
  %996 = vmatpush1.msra.mxu0 0.0
  %997 = vmatprep.subr.mxu0 0.0
  %998 = vmatpush1.msra.mxu0 0.0
  %999 = vmatprep.subr.mxu0 0.0
  %1000 = vmatpush1.msra.mxu0 0.0
  %1001 = vmatprep.subr.mxu0 0.0
  %1002 = vmatpush1.msra.mxu0 0.0
  %1003 = vmatprep.subr.mxu0 0.0
  %1004 = vmatpush1.msra.mxu0 0.0
  %1005 = vmatprep.subr.mxu0 0.0
  %1006 = vmatpush1.msra.mxu0 0.0
  %1007 = vmatprep.subr.mxu0 0.0
  %1008 = vmatpush1.msra.mxu0 0.0
  %1009 = vmatprep.subr.mxu0 0.0
  %1010 = vmatpush1.msra.mxu0 0.0
  %1011 = vmatprep.subr.mxu0 0.0
  %1012 = vmatpush1.msra.mxu0 0.0
  %1013 = vmatprep.subr.mxu0 0.0
  %1014 = vmatpush1.msra.mxu0 0.0
  %1015 = vmatprep.subr.mxu0 0.0
  %1016 = vmatpush1.msra.mxu0 0.0
  %1017 = vmatprep.subr.mxu0 0.0
  %1018 = vmatpush1.msra.mxu0 0.0
  %1019 = vmatprep.subr.mxu0 0.0
  %1020 = vmatpush1.msra.mxu0 0.0
  %1021 = vmatprep.subr.mxu0 0.0
  %1022 = vmatpush1.msra.mxu0 0.0
  %1023 = vmatprep.subr.mxu0 0.0
  %1024 = vmatpush1.msra.mxu0 0.0
  %1025 = vmatprep.mubr.f32.mxu0 0.0
  %1026 = vmatmul.mubr.f32.gmra.mrb[0].mxu0 %v956
  %v1027 = vpop.f32.mrb[0].mxu0
  %v1028 = vadd.f32 %v948, %v1027
  %v1029 = vpop.f32.mrb[0].mxu0
  %v1030 = vadd.f32 %v948, %v1029
  %1031 = vmatprep.mubr.f32.mxu0 0.0
  %1032 = vmatmul.mubr.f32.gmra.mrb[0].mxu0 %v959
  %v1033 = vpop.f32.mrb[0].mxu0
  %v1034 = vadd.f32 %v953, %v1033
  %v1035 = vpop.f32.mrb[0].mxu0
  %v1036 = vadd.f32 %v953, %v1035
  %1037 = vdwg.mxu0
  %v1038 = vmax.f32 %v1028, 0.0
  %v1039 = vmax.f32 %v1030, 0.0
  %v1040 = vmax.f32 %v1034, 0.0
  %v1041 = vmax.f32 %v1036, 0.0
  %s1042 = scalar_lea.vmem %s7, 32
  %1043 = vst [vmem:[%s1042] sm:$0xff] %v1038
  %1044 = vst [vmem:[%s1042 + $0x8] sm:$0xff] %v1039
  %1045 = vst [vmem:[%s1042 + $0x10] sm:$0xff] %v1040
  %1046 = vst [vmem:[%s1042 + $0x18] sm:$0xff] %v1041
  // Predicated region
  $region30: #{quantizable_model_forward.1} parent=0 // pred_check
    _
  $region31: #{quantizable_model_forward.1} parent=0 // pred_check_branch
    %1048 = sbr.rel (0) target = $region33
  $region32: #{quantizable_model_forward.1} parent=0 // pred_region
    _
  $region33: #{quantizable_model_forward.1} parent=0 // pred_fallthru
    _
  // Predicated region
  $region34: #{quantizable_model_forward.1} parent=0 // pred_check
    _
  $region35: #{quantizable_model_forward.1} parent=0 // pred_check_branch
    %1050 = sbr.rel (0) target = $region37
  $region36: #{quantizable_model_forward.1} parent=0 // pred_region
    _
  $region37: #{quantizable_model_forward.1} parent=0 // pred_fallthru
    _

</llo_original>
